<compile_context>
chip_gen: v7x
topology: tpu7x:2x2x1
jax: 0.10.0
libtpu: 0.0.40
codegen_flags: <defaults>
</compile_context>

<pallas_src>
import math

import jax
import jax.numpy as jnp
from jax.experimental import pallas as pl
from jax.experimental.pallas import tpu as pltpu

# ----------------------------- config (small) -------------------------------
B = 2          # batch
S = 8          # real token sequence length
N_SOFT = 8     # soft-prompt tokens prepended by the Template
L = N_SOFT + S # wrapped sequence length
BL = B * L     # flattened batch*sequence rows
H = 128        # hidden size
F = 256        # MLP inner size
V = 256        # vocab size (LM head output)
EPS = 1e-5


# ------------------------------ kernel helpers -------------------------------
def _layernorm(x, g, b):
    mu = jnp.mean(x, axis=-1, keepdims=True)
    var = jnp.mean((x - mu) ** 2, axis=-1, keepdims=True)
    return (x - mu) * jax.lax.rsqrt(var + EPS) * g + b


def _gelu(x):
    c = math.sqrt(2.0 / math.pi)
    return 0.5 * x * (1.0 + jnp.tanh(c * (x + 0.044715 * x * x * x)))


# ------------------------------ Pallas kernel -------------------------------
def prompt_lm_kernel(ids_ref, bias_ref, embed_ref, soft_ref, pos_ref,
                     wqkv_ref, wo_ref, w1_ref, w2_ref, wlm_ref, small_ref,
                     out_ref, x_scr):
    """Fused Template glue + transformer block + LM head (single invocation)."""
    # --- unpack the small packed params: (8, F) f32 ---
    ln1_g = small_ref[0:1, 0:H]
    ln1_b = small_ref[1:2, 0:H]
    ln2_g = small_ref[2:3, 0:H]
    ln2_b = small_ref[3:4, 0:H]
    lnf_g = small_ref[4:5, 0:H]
    lnf_b = small_ref[5:6, 0:H]
    b1 = small_ref[6:7, :]        # (1, F)
    b2 = small_ref[7:8, 0:H]      # (1, H)

    # --- Template: token-embedding gather as a one-hot MXU matmul (exact) ---
    ids = ids_ref[...]                                            # (B*S, 1) i32
    vocab_iota = jax.lax.broadcasted_iota(jnp.int32, (B * S, V), 1)
    onehot = (vocab_iota == ids).astype(jnp.float32)              # (B*S, V)
    tok_emb = jnp.dot(onehot, embed_ref[...],
                      preferred_element_type=jnp.float32)         # (B*S, H)

    # --- Template: prepend soft prompt + positional embeddings, flattened ---
    soft = soft_ref[...]          # (N_SOFT, H)
    pos = pos_ref[...]            # (L, H)
    for b in range(B):            # static Python loop; all offsets multiples of 8
        x_scr[pl.ds(b * L, N_SOFT), :] = soft + pos[0:N_SOFT, :]
        x_scr[pl.ds(b * L + N_SOFT, S), :] = (
            tok_emb[b * S:(b + 1) * S, :] + pos[N_SOFT:L, :])
    x = x_scr[...]                                                # (BL, H) f32

    # --- self-attention (single head), fused QKV bf16 matmul ---
    h = _layernorm(x, ln1_g, ln1_b)
    qkv = jnp.dot(h.astype(jnp.bfloat16), wqkv_ref[...],
                  preferred_element_type=jnp.float32)             # (BL, 3H)
    q = qkv[:, 0:H]
    k = qkv[:, H:2 * H]
    v = qkv[:, 2 * H:3 * H]

    scores = jnp.dot(q, k.T, preferred_element_type=jnp.float32)  # (BL, BL)
    scores = scores * (1.0 / math.sqrt(H)) + bias_ref[...]        # block-diag bias

    s_max = jnp.max(scores, axis=-1, keepdims=True)
    e = jnp.exp(scores - s_max)
    p = e * pl.reciprocal(jnp.sum(e, axis=-1, keepdims=True), approx=True)

    attn = jnp.dot(p.astype(jnp.bfloat16), v.astype(jnp.bfloat16),
                   preferred_element_type=jnp.float32)
    x = x + jnp.dot(attn.astype(jnp.bfloat16), wo_ref[...],
                    preferred_element_type=jnp.float32)

    # --- MLP ---
    h = _layernorm(x, ln2_g, ln2_b)
    ff = _gelu(jnp.dot(h.astype(jnp.bfloat16), w1_ref[...],
                       preferred_element_type=jnp.float32) + b1)
    x = x + jnp.dot(ff.astype(jnp.bfloat16), w2_ref[...],
                    preferred_element_type=jnp.float32) + b2

    # --- final LN + LM head ---
    h = _layernorm(x, lnf_g, lnf_b)
    out_ref[...] = jnp.dot(h.astype(jnp.bfloat16), wlm_ref[...],
                           preferred_element_type=jnp.float32)    # (BL, V)


def _spec2d(shape):
    return pl.BlockSpec(shape, lambda i: (0, 0))


def prompt_lm_pallas(ids, bias, kp):
    """ids: (B*S, 1) int32, bias: (BL, BL) f32 additive mask -> (BL, V) f32."""
    names = ["embed", "soft", "pos", "wqkv", "wo", "w1", "w2", "wlm", "small"]
    inputs = [ids, bias] + [kp[n] for n in names]
    return pl.pallas_call(
        prompt_lm_kernel,
        out_shape=jax.ShapeDtypeStruct((BL, V), jnp.float32),
        grid=(1,),
        in_specs=[_spec2d(a.shape) for a in inputs],
        out_specs=pl.BlockSpec((BL, V), lambda i: (0, 0)),
        scratch_shapes=[pltpu.VMEM((BL, H), jnp.float32)],
        compiler_params=pltpu.CompilerParams(
            dimension_semantics=("arbitrary",)),
    )(*inputs)


# -------------------- PromptModel.forward equivalent ------------------------
@jax.jit
def prompt_model_forward(input_ids, attention_mask, kparams):
    """batch = template.process_batch(batch); outputs = model(**input_batch)."""
    # Template glue that stays in the wrapper: the flattened-batch additive
    # attention bias (block-diagonal so batch rows never attend cross-batch).
    soft_mask = jnp.ones((B, N_SOFT), jnp.float32)
    wrapped_mask = jnp.concatenate(
        [soft_mask, attention_mask.astype(jnp.float32)], axis=1)    # (B, L)
    flat_mask = wrapped_mask.reshape(BL)
    row_batch = jnp.arange(BL, dtype=jnp.int32) // L
    same_batch = (row_batch[:, None] == row_batch[None, :]).astype(jnp.float32)
    attend = same_batch * flat_mask[None, :]                        # (BL, BL)
    bias = (attend - 1.0) * 1e9                                     # 0 / -1e9

    ids = input_ids.reshape(B * S, 1).astype(jnp.int32)
    logits_flat = prompt_lm_pallas(ids, bias, kparams)              # (BL, V)
    return logits_flat.reshape(B, L, V)


# ------------------------------- param init ---------------------------------
def init_params(key):
    ks = jax.random.split(key, 10)
    n = lambda k, shape, s=0.02: jax.random.normal(k, shape, jnp.float32) * s
    return {
        "embed":       n(ks[0], (V, H)),
        "soft_prompt": n(ks[1], (N_SOFT, H)),
        "pos_emb":     n(ks[2], (L, H)),
        "ln1_g": jnp.ones((H,), jnp.float32), "ln1_b": jnp.zeros((H,), jnp.float32),
        "wq": n(ks[3], (H, H)), "wk": n(ks[4], (H, H)),
        "wv": n(ks[5], (H, H)), "wo": n(ks[6], (H, H)),
        "ln2_g": jnp.ones((H,), jnp.float32), "ln2_b": jnp.zeros((H,), jnp.float32),
        "w1": n(ks[7], (H, F)), "b1": jnp.zeros((F,), jnp.float32),
        "w2": n(ks[8], (F, H)), "b2": jnp.zeros((H,), jnp.float32),
        "lnf_g": jnp.ones((H,), jnp.float32), "lnf_b": jnp.zeros((H,), jnp.float32),
        "wlm": n(ks[9], (H, V)),
    }


def prepare_kernel_params(p):
    """One-time packing: fused bf16 QKV weight, bf16 MXU weights, and all
    tiny LN/bias vectors packed into a single (8, F) f32 array."""
    small = jnp.zeros((8, F), jnp.float32)
    small = small.at[0, :H].set(p["ln1_g"])
    small = small.at[1, :H].set(p["ln1_b"])
    small = small.at[2, :H].set(p["ln2_g"])
    small = small.at[3, :H].set(p["ln2_b"])
    small = small.at[4, :H].set(p["lnf_g"])
    small = small.at[5, :H].set(p["lnf_b"])
    small = small.at[6, :].set(p["b1"])
    small = small.at[7, :H].set(p["b2"])
    return {
        "embed": p["embed"],                   # f32: one-hot gather stays exact
        "soft":  p["soft_prompt"],
        "pos":   p["pos_emb"],
        "wqkv":  jnp.concatenate([p["wq"], p["wk"], p["wv"]],
                                 axis=1).astype(jnp.bfloat16),
        "wo":    p["wo"].astype(jnp.bfloat16),
        "w1":    p["w1"].astype(jnp.bfloat16),
        "w2":    p["w2"].astype(jnp.bfloat16),
        "wlm":   p["wlm"].astype(jnp.bfloat16),
        "small": small,
    }


if __name__ == "__main__":
    key = jax.random.PRNGKey(0)
    k_ids, k_params = jax.random.split(key)
    params = init_params(k_params)
    kparams = prepare_kernel_params(params)

    input_ids = jax.random.randint(k_ids, (B, S), 0, V, dtype=jnp.int32)
    attention_mask = jnp.ones((B, S), jnp.int32)

    # TODO(synk): signature-based forward_keys filtering / template.modify_plm
    # are host-side Python plumbing with no kernel equivalent.
    logits = prompt_model_forward(input_ids, attention_mask, kparams)
    jax.block_until_ready(logits)
    assert logits.shape == (B, L, V) and logits.dtype == jnp.float32
    assert bool(jnp.all(jnp.isfinite(logits)))
    print("KERNEL_OK")
</pallas_src>

<mosaic_0001>
module attributes {stable_mosaic.version = 11 : i64} {
  func.func @prompt_lm_kernel(%arg0: i32, %arg1: memref<16x1xi32, #tpu.memory_space<vmem>>, %arg2: memref<32x32xf32, #tpu.memory_space<vmem>>, %arg3: memref<256x128xf32, #tpu.memory_space<vmem>>, %arg4: memref<8x128xf32, #tpu.memory_space<vmem>>, %arg5: memref<16x128xf32, #tpu.memory_space<vmem>>, %arg6: memref<128x384xbf16, #tpu.memory_space<vmem>>, %arg7: memref<128x128xbf16, #tpu.memory_space<vmem>>, %arg8: memref<128x256xbf16, #tpu.memory_space<vmem>>, %arg9: memref<256x128xbf16, #tpu.memory_space<vmem>>, %arg10: memref<128x256xbf16, #tpu.memory_space<vmem>>, %arg11: memref<8x256xf32, #tpu.memory_space<vmem>>, %arg12: memref<32x256xf32, #tpu.memory_space<vmem>>, %arg13: memref<32x128xf32, #tpu.memory_space<vmem>>) attributes {dimension_semantics = [#tpu.dimension_semantics<arbitrary>], iteration_bounds = array<i64: 1>, scalar_prefetch = 0 : i64, scratch_operands = 1 : i64, tpu.core_type = #tpu.core_type<tc>, window_params = [{pipeline_mode = #tpu.pipeline_mode<synchronous>, transform_indices = @transform_0, window_bounds = array<i64: 16, 1>}, {pipeline_mode = #tpu.pipeline_mode<synchronous>, transform_indices = @transform_1, window_bounds = array<i64: 32, 32>}, {pipeline_mode = #tpu.pipeline_mode<synchronous>, transform_indices = @transform_2, window_bounds = array<i64: 256, 128>}, {pipeline_mode = #tpu.pipeline_mode<synchronous>, transform_indices = @transform_3, window_bounds = array<i64: 8, 128>}, {pipeline_mode = #tpu.pipeline_mode<synchronous>, transform_indices = @transform_4, window_bounds = array<i64: 16, 128>}, {pipeline_mode = #tpu.pipeline_mode<synchronous>, transform_indices = @transform_5, window_bounds = array<i64: 128, 384>}, {pipeline_mode = #tpu.pipeline_mode<synchronous>, transform_indices = @transform_6, window_bounds = array<i64: 128, 128>}, {pipeline_mode = #tpu.pipeline_mode<synchronous>, transform_indices = @transform_7, window_bounds = array<i64: 128, 256>}, {pipeline_mode = #tpu.pipeline_mode<synchronous>, transform_indices = @transform_8, window_bounds = array<i64: 256, 128>}, {pipeline_mode = #tpu.pipeline_mode<synchronous>, transform_indices = @transform_9, window_bounds = array<i64: 128, 256>}, {pipeline_mode = #tpu.pipeline_mode<synchronous>, transform_indices = @transform_10, window_bounds = array<i64: 8, 256>}, {pipeline_mode = #tpu.pipeline_mode<synchronous>, transform_indices = @transform_11, window_bounds = array<i64: 32, 256>}]} {
    %c0 = arith.constant 0 : index
    %c0_0 = arith.constant 0 : index
    %0 = vector.load %arg11[%c0, %c0_0] : memref<8x256xf32, #tpu.memory_space<vmem>>, vector<1x128xf32>
    %c1 = arith.constant 1 : index
    %c0_1 = arith.constant 0 : index
    %1 = vector.load %arg11[%c1, %c0_1] : memref<8x256xf32, #tpu.memory_space<vmem>>, vector<1x128xf32>
    %c2 = arith.constant 2 : index
    %c0_2 = arith.constant 0 : index
    %2 = vector.load %arg11[%c2, %c0_2] : memref<8x256xf32, #tpu.memory_space<vmem>>, vector<1x128xf32>
    %c3 = arith.constant 3 : index
    %c0_3 = arith.constant 0 : index
    %3 = vector.load %arg11[%c3, %c0_3] : memref<8x256xf32, #tpu.memory_space<vmem>>, vector<1x128xf32>
    %c4 = arith.constant 4 : index
    %c0_4 = arith.constant 0 : index
    %4 = vector.load %arg11[%c4, %c0_4] : memref<8x256xf32, #tpu.memory_space<vmem>>, vector<1x128xf32>
    %c5 = arith.constant 5 : index
    %c0_5 = arith.constant 0 : index
    %5 = vector.load %arg11[%c5, %c0_5] : memref<8x256xf32, #tpu.memory_space<vmem>>, vector<1x128xf32>
    %c6 = arith.constant 6 : index
    %c0_6 = arith.constant 0 : index
    %6 = vector.load %arg11[%c6, %c0_6] : memref<8x256xf32, #tpu.memory_space<vmem>>, vector<1x256xf32>
    %c7 = arith.constant 7 : index
    %c0_7 = arith.constant 0 : index
    %7 = vector.load %arg11[%c7, %c0_7] : memref<8x256xf32, #tpu.memory_space<vmem>>, vector<1x128xf32>
    %c0_8 = arith.constant 0 : index
    %c0_9 = arith.constant 0 : index
    %8 = vector.load %arg1[%c0_8, %c0_9] : memref<16x1xi32, #tpu.memory_space<vmem>>, vector<16x1xi32>
    %9 = tpu.iota {dimensions = array<i32: 1>} : vector<16x256xi32>
    %10 = vector.broadcast %8 : vector<16x1xi32> to vector<16x256xi32>
    %11 = arith.cmpi eq, %9, %10 : vector<16x256xi32>
    %12 = arith.extui %11 : vector<16x256xi1> to vector<16x256xi32>
    %13 = arith.sitofp %12 : vector<16x256xi32> to vector<16x256xf32>
    %c0_10 = arith.constant 0 : index
    %c0_11 = arith.constant 0 : index
    %14 = vector.load %arg3[%c0_10, %c0_11] : memref<256x128xf32, #tpu.memory_space<vmem>>, vector<256x128xf32>
    %cst = arith.constant dense<0.000000e+00> : vector<16x128xf32>
    %15 = tpu.matmul %13, %14, %cst {dimension_numbers = #tpu.dot_dimension_numbers<[1], [0], [0], [1], [0, 0, 1, 1], [], []>} : vector<16x256xf32>, vector<256x128xf32>, vector<16x128xf32> -> vector<16x128xf32>
    %c0_12 = arith.constant 0 : index
    %c0_13 = arith.constant 0 : index
    %16 = vector.load %arg4[%c0_12, %c0_13] : memref<8x128xf32, #tpu.memory_space<vmem>>, vector<8x128xf32>
    %c0_14 = arith.constant 0 : index
    %c0_15 = arith.constant 0 : index
    %17 = vector.load %arg5[%c0_14, %c0_15] : memref<16x128xf32, #tpu.memory_space<vmem>>, vector<16x128xf32>
    %18 = vector.extract_strided_slice %17 {offsets = [0, 0], sizes = [8, 128], strides = [1, 1]} : vector<16x128xf32> to vector<8x128xf32>
    %19 = arith.addf %16, %18 : vector<8x128xf32>
    %c0_16 = arith.constant 0 : index
    %c0_17 = arith.constant 0 : index
    %20 = vector.load %arg13[%c0_16, %c0_17] : memref<32x128xf32, #tpu.memory_space<vmem>>, vector<8x128xf32>
    tpu.vector_store %arg13[%c0_16, %c0_17], %19 {strides = array<i32>} : memref<32x128xf32, #tpu.memory_space<vmem>>, vector<8x128xf32>,
    %21 = vector.extract_strided_slice %15 {offsets = [0, 0], sizes = [8, 128], strides = [1, 1]} : vector<16x128xf32> to vector<8x128xf32>
    %22 = vector.extract_strided_slice %17 {offsets = [8, 0], sizes = [8, 128], strides = [1, 1]} : vector<16x128xf32> to vector<8x128xf32>
    %23 = arith.addf %21, %22 : vector<8x128xf32>
    %c8 = arith.constant 8 : index
    %c0_18 = arith.constant 0 : index
    %24 = vector.load %arg13[%c8, %c0_18] : memref<32x128xf32, #tpu.memory_space<vmem>>, vector<8x128xf32>
    tpu.vector_store %arg13[%c8, %c0_18], %23 {strides = array<i32>} : memref<32x128xf32, #tpu.memory_space<vmem>>, vector<8x128xf32>,
    %25 = vector.extract_strided_slice %17 {offsets = [0, 0], sizes = [8, 128], strides = [1, 1]} : vector<16x128xf32> to vector<8x128xf32>
    %26 = arith.addf %16, %25 : vector<8x128xf32>
    %c16 = arith.constant 16 : index
    %c0_19 = arith.constant 0 : index
    %27 = vector.load %arg13[%c16, %c0_19] : memref<32x128xf32, #tpu.memory_space<vmem>>, vector<8x128xf32>
    tpu.vector_store %arg13[%c16, %c0_19], %26 {strides = array<i32>} : memref<32x128xf32, #tpu.memory_space<vmem>>, vector<8x128xf32>,
    %28 = vector.extract_strided_slice %15 {offsets = [8, 0], sizes = [8, 128], strides = [1, 1]} : vector<16x128xf32> to vector<8x128xf32>
    %29 = vector.extract_strided_slice %17 {offsets = [8, 0], sizes = [8, 128], strides = [1, 1]} : vector<16x128xf32> to vector<8x128xf32>
    %30 = arith.addf %28, %29 : vector<8x128xf32>
    %c24 = arith.constant 24 : index
    %c0_20 = arith.constant 0 : index
    %31 = vector.load %arg13[%c24, %c0_20] : memref<32x128xf32, #tpu.memory_space<vmem>>, vector<8x128xf32>
    tpu.vector_store %arg13[%c24, %c0_20], %30 {strides = array<i32>} : memref<32x128xf32, #tpu.memory_space<vmem>>, vector<8x128xf32>,
    %c0_21 = arith.constant 0 : index
    %c0_22 = arith.constant 0 : index
    %32 = vector.load %arg13[%c0_21, %c0_22] : memref<32x128xf32, #tpu.memory_space<vmem>>, vector<32x128xf32>
    %cst_23 = arith.constant dense<0.000000e+00> : vector<32xf32>
    %33 = vector.multi_reduction <add>, %32, %cst_23 [1] : vector<32x128xf32> to vector<32xf32>
    %34 = vector.shape_cast %33 : vector<32xf32> to vector<32x1xf32>
    %cst_24 = arith.constant 1.280000e+02 : f32
    %35 = vector.broadcast %cst_24 : f32 to vector<32x1xf32>
    %36 = arith.divf %34, %35 : vector<32x1xf32>
    %37 = vector.broadcast %36 : vector<32x1xf32> to vector<32x128xf32>
    %38 = arith.subf %32, %37 : vector<32x128xf32>
    %39 = arith.mulf %38, %38 : vector<32x128xf32>
    %cst_25 = arith.constant dense<0.000000e+00> : vector<32xf32>
    %40 = vector.multi_reduction <add>, %39, %cst_25 [1] : vector<32x128xf32> to vector<32xf32>
    %41 = vector.shape_cast %40 : vector<32xf32> to vector<32x1xf32>
    %cst_26 = arith.constant 1.280000e+02 : f32
    %42 = vector.broadcast %cst_26 : f32 to vector<32x1xf32>
    %43 = arith.divf %41, %42 : vector<32x1xf32>
    %44 = vector.broadcast %36 : vector<32x1xf32> to vector<32x128xf32>
    %45 = arith.subf %32, %44 : vector<32x128xf32>
    %cst_27 = arith.constant 9.99999974E-6 : f32
    %46 = vector.broadcast %cst_27 : f32 to vector<32x1xf32>
    %47 = arith.addf %43, %46 : vector<32x1xf32>
    %48 = math.rsqrt %47 : vector<32x1xf32>
    %49 = vector.broadcast %48 : vector<32x1xf32> to vector<32x128xf32>
    %50 = arith.mulf %45, %49 : vector<32x128xf32>
    %51 = vector.broadcast %0 : vector<1x128xf32> to vector<32x128xf32>
    %52 = arith.mulf %50, %51 : vector<32x128xf32>
    %53 = vector.broadcast %1 : vector<1x128xf32> to vector<32x128xf32>
    %54 = arith.addf %52, %53 : vector<32x128xf32>
    %55 = arith.truncf %54 : vector<32x128xf32> to vector<32x128xbf16>
    %c0_28 = arith.constant 0 : index
    %c0_29 = arith.constant 0 : index
    %56 = vector.load %arg6[%c0_28, %c0_29] : memref<128x384xbf16, #tpu.memory_space<vmem>>, vector<128x384xbf16>
    %cst_30 = arith.constant dense<0.000000e+00> : vector<32x384xf32>
    %57 = tpu.matmul %55, %56, %cst_30 {dimension_numbers = #tpu.dot_dimension_numbers<[1], [0], [0], [1], [0, 0, 1, 1], [], []>} : vector<32x128xbf16>, vector<128x384xbf16>, vector<32x384xf32> -> vector<32x384xf32>
    %58 = vector.extract_strided_slice %57 {offsets = [0, 0], sizes = [32, 128], strides = [1, 1]} : vector<32x384xf32> to vector<32x128xf32>
    %59 = vector.extract_strided_slice %57 {offsets = [0, 128], sizes = [32, 128], strides = [1, 1]} : vector<32x384xf32> to vector<32x128xf32>
    %60 = vector.extract_strided_slice %57 {offsets = [0, 256], sizes = [32, 128], strides = [1, 1]} : vector<32x384xf32> to vector<32x128xf32>
    %61 = tpu.transpose %59, [1, 0] : vector<32x128xf32> -> vector<128x32xf32>
    %cst_31 = arith.constant dense<0.000000e+00> : vector<32x32xf32>
    %62 = tpu.matmul %58, %61, %cst_31 {dimension_numbers = #tpu.dot_dimension_numbers<[1], [0], [0], [1], [0, 0, 1, 1], [], []>} : vector<32x128xf32>, vector<128x32xf32>, vector<32x32xf32> -> vector<32x32xf32>
    %cst_32 = arith.constant 0.0883883461 : f32
    %63 = vector.broadcast %cst_32 : f32 to vector<32x32xf32>
    %64 = arith.mulf %62, %63 : vector<32x32xf32>
    %c0_33 = arith.constant 0 : index
    %c0_34 = arith.constant 0 : index
    %65 = vector.load %arg2[%c0_33, %c0_34] : memref<32x32xf32, #tpu.memory_space<vmem>>, vector<32x32xf32>
    %66 = arith.addf %64, %65 : vector<32x32xf32>
    %cst_35 = arith.constant dense<0xFF800000> : vector<32xf32>
    %67 = vector.multi_reduction <maximumf>, %66, %cst_35 [1] : vector<32x32xf32> to vector<32xf32>
    %68 = vector.shape_cast %67 : vector<32xf32> to vector<32x1xf32>
    %69 = vector.broadcast %68 : vector<32x1xf32> to vector<32x32xf32>
    %70 = arith.subf %66, %69 : vector<32x32xf32>
    %71 = math.exp %70 : vector<32x32xf32>
    %cst_36 = arith.constant dense<0.000000e+00> : vector<32xf32>
    %72 = vector.multi_reduction <add>, %71, %cst_36 [1] : vector<32x32xf32> to vector<32xf32>
    %73 = vector.shape_cast %72 : vector<32xf32> to vector<32x1xf32>
    %74 = tpu.reciprocal %73 {approx = true} : vector<32x1xf32> -> vector<32x1xf32>
    %75 = vector.broadcast %74 : vector<32x1xf32> to vector<32x32xf32>
    %76 = arith.mulf %71, %75 : vector<32x32xf32>
    %77 = arith.truncf %76 : vector<32x32xf32> to vector<32x32xbf16>
    %78 = arith.truncf %60 : vector<32x128xf32> to vector<32x128xbf16>
    %cst_37 = arith.constant dense<0.000000e+00> : vector<32x128xf32>
    %79 = tpu.matmul %77, %78, %cst_37 {dimension_numbers = #tpu.dot_dimension_numbers<[1], [0], [0], [1], [0, 0, 1, 1], [], []>} : vector<32x32xbf16>, vector<32x128xbf16>, vector<32x128xf32> -> vector<32x128xf32>
    %80 = arith.truncf %79 : vector<32x128xf32> to vector<32x128xbf16>
    %c0_38 = arith.constant 0 : index
    %c0_39 = arith.constant 0 : index
    %81 = vector.load %arg7[%c0_38, %c0_39] : memref<128x128xbf16, #tpu.memory_space<vmem>>, vector<128x128xbf16>
    %cst_40 = arith.constant dense<0.000000e+00> : vector<32x128xf32>
    %82 = tpu.matmul %80, %81, %cst_40 {dimension_numbers = #tpu.dot_dimension_numbers<[1], [0], [0], [1], [0, 0, 1, 1], [], []>} : vector<32x128xbf16>, vector<128x128xbf16>, vector<32x128xf32> -> vector<32x128xf32>
    %83 = arith.addf %32, %82 : vector<32x128xf32>
    %cst_41 = arith.constant dense<0.000000e+00> : vector<32xf32>
    %84 = vector.multi_reduction <add>, %83, %cst_41 [1] : vector<32x128xf32> to vector<32xf32>
    %85 = vector.shape_cast %84 : vector<32xf32> to vector<32x1xf32>
    %cst_42 = arith.constant 1.280000e+02 : f32
    %86 = vector.broadcast %cst_42 : f32 to vector<32x1xf32>
    %87 = arith.divf %85, %86 : vector<32x1xf32>
    %88 = vector.broadcast %87 : vector<32x1xf32> to vector<32x128xf32>
    %89 = arith.subf %83, %88 : vector<32x128xf32>
    %90 = arith.mulf %89, %89 : vector<32x128xf32>
    %cst_43 = arith.constant dense<0.000000e+00> : vector<32xf32>
    %91 = vector.multi_reduction <add>, %90, %cst_43 [1] : vector<32x128xf32> to vector<32xf32>
    %92 = vector.shape_cast %91 : vector<32xf32> to vector<32x1xf32>
    %cst_44 = arith.constant 1.280000e+02 : f32
    %93 = vector.broadcast %cst_44 : f32 to vector<32x1xf32>
    %94 = arith.divf %92, %93 : vector<32x1xf32>
    %95 = vector.broadcast %87 : vector<32x1xf32> to vector<32x128xf32>
    %96 = arith.subf %83, %95 : vector<32x128xf32>
    %cst_45 = arith.constant 9.99999974E-6 : f32
    %97 = vector.broadcast %cst_45 : f32 to vector<32x1xf32>
    %98 = arith.addf %94, %97 : vector<32x1xf32>
    %99 = math.rsqrt %98 : vector<32x1xf32>
    %100 = vector.broadcast %99 : vector<32x1xf32> to vector<32x128xf32>
    %101 = arith.mulf %96, %100 : vector<32x128xf32>
    %102 = vector.broadcast %2 : vector<1x128xf32> to vector<32x128xf32>
    %103 = arith.mulf %101, %102 : vector<32x128xf32>
    %104 = vector.broadcast %3 : vector<1x128xf32> to vector<32x128xf32>
    %105 = arith.addf %103, %104 : vector<32x128xf32>
    %106 = arith.truncf %105 : vector<32x128xf32> to vector<32x128xbf16>
    %c0_46 = arith.constant 0 : index
    %c0_47 = arith.constant 0 : index
    %107 = vector.load %arg8[%c0_46, %c0_47] : memref<128x256xbf16, #tpu.memory_space<vmem>>, vector<128x256xbf16>
    %cst_48 = arith.constant dense<0.000000e+00> : vector<32x256xf32>
    %108 = tpu.matmul %106, %107, %cst_48 {dimension_numbers = #tpu.dot_dimension_numbers<[1], [0], [0], [1], [0, 0, 1, 1], [], []>} : vector<32x128xbf16>, vector<128x256xbf16>, vector<32x256xf32> -> vector<32x256xf32>
    %109 = vector.broadcast %6 : vector<1x256xf32> to vector<32x256xf32>
    %110 = arith.addf %108, %109 : vector<32x256xf32>
    %cst_49 = arith.constant 5.000000e-01 : f32
    %111 = vector.broadcast %cst_49 : f32 to vector<32x256xf32>
    %112 = arith.mulf %111, %110 : vector<32x256xf32>
    %cst_50 = arith.constant 4.471500e-02 : f32
    %113 = vector.broadcast %cst_50 : f32 to vector<32x256xf32>
    %114 = arith.mulf %113, %110 : vector<32x256xf32>
    %115 = arith.mulf %114, %110 : vector<32x256xf32>
    %116 = arith.mulf %115, %110 : vector<32x256xf32>
    %117 = arith.addf %110, %116 : vector<32x256xf32>
    %cst_51 = arith.constant 0.797884583 : f32
    %118 = vector.broadcast %cst_51 : f32 to vector<32x256xf32>
    %119 = arith.mulf %118, %117 : vector<32x256xf32>
    %120 = math.tanh %119 : vector<32x256xf32>
    %cst_52 = arith.constant 1.000000e+00 : f32
    %121 = vector.broadcast %cst_52 : f32 to vector<32x256xf32>
    %122 = arith.addf %121, %120 : vector<32x256xf32>
    %123 = arith.mulf %112, %122 : vector<32x256xf32>
    %124 = arith.truncf %123 : vector<32x256xf32> to vector<32x256xbf16>
    %c0_53 = arith.constant 0 : index
    %c0_54 = arith.constant 0 : index
    %125 = vector.load %arg9[%c0_53, %c0_54] : memref<256x128xbf16, #tpu.memory_space<vmem>>, vector<256x128xbf16>
    %cst_55 = arith.constant dense<0.000000e+00> : vector<32x128xf32>
    %126 = tpu.matmul %124, %125, %cst_55 {dimension_numbers = #tpu.dot_dimension_numbers<[1], [0], [0], [1], [0, 0, 1, 1], [], []>} : vector<32x256xbf16>, vector<256x128xbf16>, vector<32x128xf32> -> vector<32x128xf32>
    %127 = arith.addf %83, %126 : vector<32x128xf32>
    %128 = vector.broadcast %7 : vector<1x128xf32> to vector<32x128xf32>
    %129 = arith.addf %127, %128 : vector<32x128xf32>
    %cst_56 = arith.constant dense<0.000000e+00> : vector<32xf32>
    %130 = vector.multi_reduction <add>, %129, %cst_56 [1] : vector<32x128xf32> to vector<32xf32>
    %131 = vector.shape_cast %130 : vector<32xf32> to vector<32x1xf32>
    %cst_57 = arith.constant 1.280000e+02 : f32
    %132 = vector.broadcast %cst_57 : f32 to vector<32x1xf32>
    %133 = arith.divf %131, %132 : vector<32x1xf32>
    %134 = vector.broadcast %133 : vector<32x1xf32> to vector<32x128xf32>
    %135 = arith.subf %129, %134 : vector<32x128xf32>
    %136 = arith.mulf %135, %135 : vector<32x128xf32>
    %cst_58 = arith.constant dense<0.000000e+00> : vector<32xf32>
    %137 = vector.multi_reduction <add>, %136, %cst_58 [1] : vector<32x128xf32> to vector<32xf32>
    %138 = vector.shape_cast %137 : vector<32xf32> to vector<32x1xf32>
    %cst_59 = arith.constant 1.280000e+02 : f32
    %139 = vector.broadcast %cst_59 : f32 to vector<32x1xf32>
    %140 = arith.divf %138, %139 : vector<32x1xf32>
    %141 = vector.broadcast %133 : vector<32x1xf32> to vector<32x128xf32>
    %142 = arith.subf %129, %141 : vector<32x128xf32>
    %cst_60 = arith.constant 9.99999974E-6 : f32
    %143 = vector.broadcast %cst_60 : f32 to vector<32x1xf32>
    %144 = arith.addf %140, %143 : vector<32x1xf32>
    %145 = math.rsqrt %144 : vector<32x1xf32>
    %146 = vector.broadcast %145 : vector<32x1xf32> to vector<32x128xf32>
    %147 = arith.mulf %142, %146 : vector<32x128xf32>
    %148 = vector.broadcast %4 : vector<1x128xf32> to vector<32x128xf32>
    %149 = arith.mulf %147, %148 : vector<32x128xf32>
    %150 = vector.broadcast %5 : vector<1x128xf32> to vector<32x128xf32>
    %151 = arith.addf %149, %150 : vector<32x128xf32>
    %152 = arith.truncf %151 : vector<32x128xf32> to vector<32x128xbf16>
    %c0_61 = arith.constant 0 : index
    %c0_62 = arith.constant 0 : index
    %153 = vector.load %arg10[%c0_61, %c0_62] : memref<128x256xbf16, #tpu.memory_space<vmem>>, vector<128x256xbf16>
    %cst_63 = arith.constant dense<0.000000e+00> : vector<32x256xf32>
    %154 = tpu.matmul %152, %153, %cst_63 {dimension_numbers = #tpu.dot_dimension_numbers<[1], [0], [0], [1], [0, 0, 1, 1], [], []>} : vector<32x128xbf16>, vector<128x256xbf16>, vector<32x256xf32> -> vector<32x256xf32>
    %c0_64 = arith.constant 0 : index
    %c0_65 = arith.constant 0 : index
    %155 = vector.load %arg12[%c0_64, %c0_65] : memref<32x256xf32, #tpu.memory_space<vmem>>, vector<32x256xf32>
    tpu.vector_store %arg12[%c0_64, %c0_65], %154 {strides = array<i32>} : memref<32x256xf32, #tpu.memory_space<vmem>>, vector<32x256xf32>,
    return
  }
  func.func @transform_0(%arg0: i32) -> (i32, i32) {
    %c0_i32 = arith.constant 0 : i32
    %c0_i32_0 = arith.constant 0 : i32
    %c0_i32_1 = arith.constant 0 : i32
    return %c0_i32, %c0_i32_0 : i32, i32
  }
  func.func @transform_1(%arg0: i32) -> (i32, i32) {
    %c0_i32 = arith.constant 0 : i32
    %c0_i32_0 = arith.constant 0 : i32
    %c0_i32_1 = arith.constant 0 : i32
    return %c0_i32, %c0_i32_0 : i32, i32
  }
  func.func @transform_2(%arg0: i32) -> (i32, i32) {
    %c0_i32 = arith.constant 0 : i32
    %c0_i32_0 = arith.constant 0 : i32
    %c0_i32_1 = arith.constant 0 : i32
    return %c0_i32, %c0_i32_0 : i32, i32
  }
  func.func @transform_3(%arg0: i32) -> (i32, i32) {
    %c0_i32 = arith.constant 0 : i32
    %c0_i32_0 = arith.constant 0 : i32
    %c0_i32_1 = arith.constant 0 : i32
    return %c0_i32, %c0_i32_0 : i32, i32
  }
  func.func @transform_4(%arg0: i32) -> (i32, i32) {
    %c0_i32 = arith.constant 0 : i32
    %c0_i32_0 = arith.constant 0 : i32
    %c0_i32_1 = arith.constant 0 : i32
    return %c0_i32, %c0_i32_0 : i32, i32
  }
  func.func @transform_5(%arg0: i32) -> (i32, i32) {
    %c0_i32 = arith.constant 0 : i32
    %c0_i32_0 = arith.constant 0 : i32
    %c0_i32_1 = arith.constant 0 : i32
    return %c0_i32, %c0_i32_0 : i32, i32
  }
  func.func @transform_6(%arg0: i32) -> (i32, i32) {
    %c0_i32 = arith.constant 0 : i32
    %c0_i32_0 = arith.constant 0 : i32
    %c0_i32_1 = arith.constant 0 : i32
    return %c0_i32, %c0_i32_0 : i32, i32
  }
  func.func @transform_7(%arg0: i32) -> (i32, i32) {
    %c0_i32 = arith.constant 0 : i32
    %c0_i32_0 = arith.constant 0 : i32
    %c0_i32_1 = arith.constant 0 : i32
    return %c0_i32, %c0_i32_0 : i32, i32
  }
  func.func @transform_8(%arg0: i32) -> (i32, i32) {
    %c0_i32 = arith.constant 0 : i32
    %c0_i32_0 = arith.constant 0 : i32
    %c0_i32_1 = arith.constant 0 : i32
    return %c0_i32, %c0_i32_0 : i32, i32
  }
  func.func @transform_9(%arg0: i32) -> (i32, i32) {
    %c0_i32 = arith.constant 0 : i32
    %c0_i32_0 = arith.constant 0 : i32
    %c0_i32_1 = arith.constant 0 : i32
    return %c0_i32, %c0_i32_0 : i32, i32
  }
  func.func @transform_10(%arg0: i32) -> (i32, i32) {
    %c0_i32 = arith.constant 0 : i32
    %c0_i32_0 = arith.constant 0 : i32
    %c0_i32_1 = arith.constant 0 : i32
    return %c0_i32, %c0_i32_0 : i32, i32
  }
  func.func @transform_11(%arg0: i32) -> (i32, i32) {
    %c0_i32 = arith.constant 0 : i32
    %c0_i32_0 = arith.constant 0 : i32
    %c0_i32_1 = arith.constant 0 : i32
    return %c0_i32, %c0_i32_0 : i32, i32
  }
}

</mosaic_0001>

<llo_original>
// kernel: mul.8
$region0: #{mul.8}
  %s0 = inlined_call_operand.vmem [shape: f32[2,16], index: 0, kind: input, shape index: {}]
  %s1 = inlined_call_operand.vmem [shape: f32[32], index: 1, kind: output, shape index: {}]
  $region1: #{mul.8} parent=0
    #allocation0 [shape = 'u8[4096]{0}', space=vmem, size = 0x1000, scoped, tag = 'scoped mem for output reshape']
    #allocation1 [shape = 'u8[4096]{0}', space=vmem, size = 0x1000, scoped, tag = 'scoped mem for input reshape']
    %s3 = sshllo.u32 0, 2
    %v4 = vld [vmem:[%s0] sm:%s3]
    %5 = vst [vmem:[#allocation1] sm:%s3] %v4
    %v6 = vld [vmem:[#allocation1] sm:$0x1]
    %vm7 = vcmask 130048
    %8 = vst.msk [vmem:[#allocation0] sm:$0x1] %vm7, %v6
    %s9 = scalar_lea.vmem [#allocation1], 1
    %v10 = vld [vmem:[%s9] sm:$0x1]
    %11 = vrot.lane.b32.xlu0 %v10, 16
    %v12 = vpop.permute.xlu0 %11
    %vm13 = vcmask 261248
    %14 = vst.msk [vmem:[#allocation0] sm:$0x1] %vm13, %v12
    %s16 = sshllo.u32 0, 1
    %v18 = vld [vmem:[#allocation0] sm:%s16]
    %s19 = sshllo.u32 0, 1
    %20 = vst [vmem:[%s1] sm:%s19] %v18

// kernel: prompt_model_forward.1
$region0: #{prompt_model_forward.1}
  #allocation0 [shape = 'u32[]', space=smem, size = 0x4, offset = 0x4, fixed_abs, tag = 'smem constant byte address 0x4 - core index']
  #allocation1 [shape = 'u32[144,128]{1,0:T(1,128)}', space=vmem, size = 0x12000, scoped, tag = 'internal scratch']
  #allocation2 [shape = 'f32[32,128]{1,0:T(8,128)}', space=vmem, size = 0x4000, scoped, tag = 'scratch operand']
  %s0 = inlined_call_operand.vmem [shape: s32[16,1], index: 0, kind: input, shape index: {}]
  %s1 = inlined_call_operand.vmem [shape: f32[32,32], index: 1, kind: input, shape index: {}]
  %s2 = inlined_call_operand.hbm [shape: f32[256,128], index: 2, kind: input, shape index: {}]
  %s3 = inlined_call_operand.hbm [shape: f32[8,128], index: 3, kind: input, shape index: {}]
  %s4 = inlined_call_operand.vmem [shape: f32[16,128], index: 4, kind: input, shape index: {}]
  %s5 = inlined_call_operand.hbm [shape: bf16[128,384], index: 5, kind: input, shape index: {}]
  %s6 = inlined_call_operand.vmem [shape: bf16[128,128], index: 6, kind: input, shape index: {}]
  %s7 = inlined_call_operand.hbm [shape: bf16[128,256], index: 7, kind: input, shape index: {}]
  %s8 = inlined_call_operand.hbm [shape: bf16[256,128], index: 8, kind: input, shape index: {}]
  %s9 = inlined_call_operand.hbm [shape: bf16[128,256], index: 9, kind: input, shape index: {}]
  %s10 = inlined_call_operand.vmem [shape: f32[8,256], index: 10, kind: input, shape index: {}]
  %s11 = inlined_call_operand.hbm [shape: f32[32,256], index: 11, kind: output, shape index: {}]
  %s12 = sld [smem:[#allocation0]]
  $region78: #{prompt_model_forward.1} parent=0
    _
  %s14 = ssub.s32 1, %s12
  %s15 = scalar_select 0, %s14, %s12
  $region1: #{prompt_model_forward.1} parent=0
    #allocation3 [shape = 'u8[131072]{0}', space=vmem, size = 0x20000, scoped, tag = 'input window, operand 2, single buffered']
    #allocation4 [shape = 's32[1]{0}', space=sflag, size = 0x4, scoped, tag = 'scoped memory for prompt_model_forward.1']
    #allocation5 [shape = 's32[1]{0}', space=sflag, size = 0x4, scoped, tag = 'scoped memory for prompt_model_forward.1']
    #allocation6 [shape = 'u8[4096]{0}', space=vmem, size = 0x1000, scoped, tag = 'input window, operand 3, single buffered']
    #allocation7 [shape = 's32[1]{0}', space=sflag, size = 0x4, scoped, tag = 'scoped memory for prompt_model_forward.1']
    #allocation8 [shape = 'u8[98304]{0}', space=vmem, size = 0x18000, scoped, tag = 'input window, operand 5, single buffered']
    #allocation9 [shape = 'u8[65536]{0}', space=vmem, size = 0x10000, scoped, tag = 'input window, operand 7, single buffered']
    #allocation10 [shape = 's32[1]{0}', space=sflag, size = 0x4, scoped, tag = 'scoped memory for prompt_model_forward.1']
    #allocation11 [shape = 'u8[65536]{0}', space=vmem, size = 0x10000, scoped, tag = 'input window, operand 8, single buffered']
    #allocation12 [shape = 'u8[65536]{0}', space=vmem, size = 0x10000, scoped, tag = 'input window, operand 9, single buffered']
    #allocation13 [shape = 's32[1]{0}', space=sflag, size = 0x4, scoped, tag = 'scoped memory for prompt_model_forward.1']
    #allocation14 [shape = 'u8[32768]{0}', space=vmem, size = 0x8000, scoped, tag = 'output window, operand 0, single buffered']
    %16 = vsyncpa [#allocation4], 0
    %17 = vsyncpa [#allocation7], 0
    %18 = vsyncpa [#allocation10], 0
    %19 = vsyncpa [#allocation13], 0
    %20 = vsyncpa [#allocation5], 0
    // Predicated region
    $region2: #{prompt_model_forward.1} parent=1 // pred_check
      _
    $region3: #{prompt_model_forward.1} parent=1 // pred_check_branch
      %22 = sbr.rel (0) target = $region5
    $region4: #{prompt_model_forward.1} parent=1 // pred_region
      _
    $region5: #{prompt_model_forward.1} parent=1 // pred_fallthru
      _
    // Predicated region
    $region6: #{prompt_model_forward.1} parent=1 // pred_check
      _
    $region7: #{prompt_model_forward.1} parent=1 // pred_check_branch
      %24 = sbr.rel (0) target = $region9
    $region8: #{prompt_model_forward.1} parent=1 // pred_region
      _
    $region9: #{prompt_model_forward.1} parent=1 // pred_fallthru
      _
    // Predicated region
    $region10: #{prompt_model_forward.1} parent=1 // pred_check
      _
    $region11: #{prompt_model_forward.1} parent=1 // pred_check_branch
      %26 = sbr.rel (0) target = $region13
    $region12: #{prompt_model_forward.1} parent=1 // pred_region
      %s28 = ssub.s32 4096, 4096
      %29 = vsyncadd [#allocation4], %s28
      %s30 = sshll.u32 [#allocation3], 4
      %s31 = int_to_ptr.vmem [resolvable:$true] %s30
      %36 = dma.hbm_to_vmem [thread:$0]  %s2, 4096, %s31, [#allocation4], 128, 128, 8
    $region13: #{prompt_model_forward.1} parent=1 // pred_fallthru
      _
    // Predicated region
    $region14: #{prompt_model_forward.1} parent=1 // pred_check
      _
    $region15: #{prompt_model_forward.1} parent=1 // pred_check_branch
      %38 = sbr.rel (0) target = $region17
    $region16: #{prompt_model_forward.1} parent=1 // pred_region
      %s40 = ssub.s32 128, 128
      %41 = vsyncadd [#allocation7], %s40
      %s43 = sshll.u32 [#allocation6], 4
      %s44 = int_to_ptr.vmem [resolvable:$true] %s43
      %46 = dma.hbm_to_vmem [thread:$0]  %s3, 128, %s44, [#allocation7]
    $region17: #{prompt_model_forward.1} parent=1 // pred_fallthru
      _
    // Predicated region
    $region18: #{prompt_model_forward.1} parent=1 // pred_check
      _
    $region19: #{prompt_model_forward.1} parent=1 // pred_check_branch
      %48 = sbr.rel (0) target = $region21
    $region20: #{prompt_model_forward.1} parent=1 // pred_region
      _
    $region21: #{prompt_model_forward.1} parent=1 // pred_fallthru
      _
    // Predicated region
    $region22: #{prompt_model_forward.1} parent=1 // pred_check
      _
    $region23: #{prompt_model_forward.1} parent=1 // pred_check_branch
      %50 = sbr.rel (0) target = $region25
    $region24: #{prompt_model_forward.1} parent=1 // pred_region
      %s52 = ssub.s32 3072, 3072
      %53 = vsyncadd [#allocation7], %s52
      %s54 = sshll.u32 [#allocation8], 4
      %s55 = int_to_ptr.vmem [resolvable:$true] %s54
      %60 = dma.hbm_to_vmem [thread:$0]  %s5, 3072, %s55, [#allocation7], 192, 192, 12
    $region25: #{prompt_model_forward.1} parent=1 // pred_fallthru
      _
    // Predicated region
    $region26: #{prompt_model_forward.1} parent=1 // pred_check
      _
    $region27: #{prompt_model_forward.1} parent=1 // pred_check_branch
      %62 = sbr.rel (0) target = $region29
    $region28: #{prompt_model_forward.1} parent=1 // pred_region
      _
    $region29: #{prompt_model_forward.1} parent=1 // pred_fallthru
      _
    // Predicated region
    $region30: #{prompt_model_forward.1} parent=1 // pred_check
      _
    $region31: #{prompt_model_forward.1} parent=1 // pred_check_branch
      %64 = sbr.rel (0) target = $region33
    $region32: #{prompt_model_forward.1} parent=1 // pred_region
      %s66 = ssub.s32 2048, 2048
      %67 = vsyncadd [#allocation10], %s66
      %s68 = sshll.u32 [#allocation9], 4
      %s69 = int_to_ptr.vmem [resolvable:$true] %s68
      %74 = dma.hbm_to_vmem [thread:$0]  %s7, 2048, %s69, [#allocation10], 128, 128, 8
    $region33: #{prompt_model_forward.1} parent=1 // pred_fallthru
      _
    // Predicated region
    $region34: #{prompt_model_forward.1} parent=1 // pred_check
      _
    $region35: #{prompt_model_forward.1} parent=1 // pred_check_branch
      %76 = sbr.rel (0) target = $region37
    $region36: #{prompt_model_forward.1} parent=1 // pred_region
      %s78 = ssub.s32 2048, 2048
      %79 = vsyncadd [#allocation10], %s78
      %s80 = sshll.u32 [#allocation11], 4
      %s81 = int_to_ptr.vmem [resolvable:$true] %s80
      %86 = dma.hbm_to_vmem [thread:$0]  %s8, 2048, %s81, [#allocation10], 64, 64, 4
    $region37: #{prompt_model_forward.1} parent=1 // pred_fallthru
      _
    // Predicated region
    $region38: #{prompt_model_forward.1} parent=1 // pred_check
      _
    $region39: #{prompt_model_forward.1} parent=1 // pred_check_branch
      %88 = sbr.rel (0) target = $region41
    $region40: #{prompt_model_forward.1} parent=1 // pred_region
      %s90 = ssub.s32 2048, 2048
      %91 = vsyncadd [#allocation13], %s90
      %s92 = sshll.u32 [#allocation12], 4
      %s93 = int_to_ptr.vmem [resolvable:$true] %s92
      %98 = dma.hbm_to_vmem [thread:$0]  %s9, 2048, %s93, [#allocation13], 128, 128, 8
    $region41: #{prompt_model_forward.1} parent=1 // pred_fallthru
      _
    // Predicated region
    $region42: #{prompt_model_forward.1} parent=1 // pred_check
      _
    $region43: #{prompt_model_forward.1} parent=1 // pred_check_branch
      %100 = sbr.rel (0) target = $region45
    $region44: #{prompt_model_forward.1} parent=1 // pred_region
      _
    $region45: #{prompt_model_forward.1} parent=1 // pred_fallthru
      _
    // Predicated region
    $region46: #{prompt_model_forward.1} parent=1 // pred_check
      _
    $region47: #{prompt_model_forward.1} parent=1 // pred_check_branch
      %102 = sbr.rel (0) target = $region49
    $region48: #{prompt_model_forward.1} parent=1 // pred_region
      %103 = dma.done [#allocation4], 4096
    $region49: #{prompt_model_forward.1} parent=1 // pred_fallthru
      _
    // Predicated region
    $region50: #{prompt_model_forward.1} parent=1 // pred_check
      _
    $region51: #{prompt_model_forward.1} parent=1 // pred_check_branch
      %105 = sbr.rel (0) target = $region53
    $region52: #{prompt_model_forward.1} parent=1 // pred_region
      %106 = dma.done [#allocation7], 128
    $region53: #{prompt_model_forward.1} parent=1 // pred_fallthru
      _
    // Predicated region
    $region54: #{prompt_model_forward.1} parent=1 // pred_check
      _
    $region55: #{prompt_model_forward.1} parent=1 // pred_check_branch
      %108 = sbr.rel (0) target = $region57
    $region56: #{prompt_model_forward.1} parent=1 // pred_region
      %109 = dma.done [#allocation7], 3072
    $region57: #{prompt_model_forward.1} parent=1 // pred_fallthru
      _
    // Predicated region
    $region58: #{prompt_model_forward.1} parent=1 // pred_check
      _
    $region59: #{prompt_model_forward.1} parent=1 // pred_check_branch
      %111 = sbr.rel (0) target = $region61
    $region60: #{prompt_model_forward.1} parent=1 // pred_region
      %112 = dma.done [#allocation10], 2048
    $region61: #{prompt_model_forward.1} parent=1 // pred_fallthru
      _
    // Predicated region
    $region62: #{prompt_model_forward.1} parent=1 // pred_check
      _
    $region63: #{prompt_model_forward.1} parent=1 // pred_check_branch
      %114 = sbr.rel (0) target = $region65
    $region64: #{prompt_model_forward.1} parent=1 // pred_region
      %115 = dma.done [#allocation10], 2048
    $region65: #{prompt_model_forward.1} parent=1 // pred_fallthru
      _
    // Predicated region
    $region66: #{prompt_model_forward.1} parent=1 // pred_check
      _
    $region67: #{prompt_model_forward.1} parent=1 // pred_check_branch
      %117 = sbr.rel (0) target = $region69
    $region68: #{prompt_model_forward.1} parent=1 // pred_region
      %118 = dma.done [#allocation13], 2048
    $region69: #{prompt_model_forward.1} parent=1 // pred_fallthru
      _
    %v120 = vld [vmem:[%s10] ss:$0 sm:$0xff]
    %v121 = vld [vmem:[%s10 + $0x1] ss:$0 sm:$0xff]
    %v122 = vld [vmem:[%s10 + $0x2] ss:$0 sm:$0xff]
    %v123 = vld [vmem:[%s10 + $0x3] ss:$0 sm:$0xff]
    %v124 = vld [vmem:[%s10 + $0x4] ss:$0 sm:$0xff]
    %v125 = vld [vmem:[%s10 + $0x5] ss:$0 sm:$0xff]
    %s126 = scalar_lea.vmem %s10, 6
    %v127 = vld [vmem:[%s126] ss:$8 sm:$0x3]
    %v128 = vld [vmem:[%s10 + $0x7] ss:$0 sm:$0xff]
    %v129 = vld [vmem:[%s0] sm:$0xff]
    %v130 = vld [vmem:[%s0 + $0x8] sm:$0xff]
    %v131 = vlaneseq
    %v132 = vand.u32 %v131, 127
    %v133 = vadd.s32 %v132, 128
    %134 = vset.pattern.permute.xlu0 0
    %135 = vperm.xlu0 %134, %v129
    %v136 = vpop.permute.xlu0 %135
    %137 = vset.pattern.permute.xlu0 0
    %138 = vperm.xlu0 %137, %v130
    %v139 = vpop.permute.xlu0 %138
    %vm140 = vcmp.eq.s32.totalorder %v132, %v136
    %vm141 = vcmp.eq.s32.totalorder %v133, %v136
    %vm142 = vcmp.eq.s32.totalorder %v132, %v139
    %vm143 = vcmp.eq.s32.totalorder %v133, %v139
    %v144 = vsel %vm140, 1, 0
    %v145 = vsel %vm141, 1, 0
    %v146 = vsel %vm142, 1, 0
    %v147 = vsel %vm143, 1, 0
    %v148 = vcvt.s32.f32 %v144
    %v149 = vcvt.s32.f32 %v145
    %v150 = vcvt.s32.f32 %v146
    %v151 = vcvt.s32.f32 %v147
    %v152 = vld [vmem:[#allocation3] sm:$0xff]
    %v153 = vld [vmem:[#allocation3 + $0x8] sm:$0xff]
    %v154 = vld [vmem:[#allocation3 + $0x10] sm:$0xff]
    %v155 = vld [vmem:[#allocation3 + $0x18] sm:$0xff]
    %v156 = vld [vmem:[#allocation3 + $0x20] sm:$0xff]
    %v157 = vld [vmem:[#allocation3 + $0x28] sm:$0xff]
    %v158 = vld [vmem:[#allocation3 + $0x30] sm:$0xff]
    %v159 = vld [vmem:[#allocation3 + $0x38] sm:$0xff]
    %v160 = vld [vmem:[#allocation3 + $0x40] sm:$0xff]
    %v161 = vld [vmem:[#allocation3 + $0x48] sm:$0xff]
    %v162 = vld [vmem:[#allocation3 + $0x50] sm:$0xff]
    %v163 = vld [vmem:[#allocation3 + $0x58] sm:$0xff]
    %v164 = vld [vmem:[#allocation3 + $0x60] sm:$0xff]
    %v165 = vld [vmem:[#allocation3 + $0x68] sm:$0xff]
    %v166 = vld [vmem:[#allocation3 + $0x70] sm:$0xff]
    %v167 = vld [vmem:[#allocation3 + $0x78] sm:$0xff]
    %v168 = vld [vmem:[#allocation3 + $0x80] sm:$0xff]
    %v169 = vld [vmem:[#allocation3 + $0x88] sm:$0xff]
    %v170 = vld [vmem:[#allocation3 + $0x90] sm:$0xff]
    %v171 = vld [vmem:[#allocation3 + $0x98] sm:$0xff]
    %v172 = vld [vmem:[#allocation3 + $0xa0] sm:$0xff]
    %v173 = vld [vmem:[#allocation3 + $0xa8] sm:$0xff]
    %v174 = vld [vmem:[#allocation3 + $0xb0] sm:$0xff]
    %v175 = vld [vmem:[#allocation3 + $0xb8] sm:$0xff]
    %v176 = vld [vmem:[#allocation3 + $0xc0] sm:$0xff]
    %v177 = vld [vmem:[#allocation3 + $0xc8] sm:$0xff]
    %v178 = vld [vmem:[#allocation3 + $0xd0] sm:$0xff]
    %v179 = vld [vmem:[#allocation3 + $0xd8] sm:$0xff]
    %v180 = vld [vmem:[#allocation3 + $0xe0] sm:$0xff]
    %v181 = vld [vmem:[#allocation3 + $0xe8] sm:$0xff]
    %v182 = vld [vmem:[#allocation3 + $0xf0] sm:$0xff]
    %v183 = vld [vmem:[#allocation3 + $0xf8] sm:$0xff]
    %184 = vmatprep.subr.mxu0 0.0
    %185 = vmatpush1.msra.mxu0 %v152
    %186 = vmatprep.subr.mxu0 0.0
    %187 = vmatpush1.msra.mxu0 %v153
    %188 = vmatprep.subr.mxu0 0.0
    %189 = vmatpush1.msra.mxu0 %v154
    %190 = vmatprep.subr.mxu0 0.0
    %191 = vmatpush1.msra.mxu0 %v155
    %192 = vmatprep.subr.mxu0 0.0
    %193 = vmatpush1.msra.mxu0 %v156
    %194 = vmatprep.subr.mxu0 0.0
    %195 = vmatpush1.msra.mxu0 %v157
    %196 = vmatprep.subr.mxu0 0.0
    %197 = vmatpush1.msra.mxu0 %v158
    %198 = vmatprep.subr.mxu0 0.0
    %199 = vmatpush1.msra.mxu0 %v159
    %200 = vmatprep.subr.mxu0 0.0
    %201 = vmatpush1.msra.mxu0 %v160
    %202 = vmatprep.subr.mxu0 0.0
    %203 = vmatpush1.msra.mxu0 %v161
    %204 = vmatprep.subr.mxu0 0.0
    %205 = vmatpush1.msra.mxu0 %v162
    %206 = vmatprep.subr.mxu0 0.0
    %207 = vmatpush1.msra.mxu0 %v163
    %208 = vmatprep.subr.mxu0 0.0
    %209 = vmatpush1.msra.mxu0 %v164
    %210 = vmatprep.subr.mxu0 0.0
    %211 = vmatpush1.msra.mxu0 %v165
    %212 = vmatprep.subr.mxu0 0.0
    %213 = vmatpush1.msra.mxu0 %v166
    %214 = vmatprep.subr.mxu0 0.0
    %215 = vmatpush1.msra.mxu0 %v167
    %216 = vmatprep.subr.mxu0 0.0
    %217 = vmatpush1.msra.mxu0 %v168
    %218 = vmatprep.subr.mxu0 0.0
    %219 = vmatpush1.msra.mxu0 %v169
    %220 = vmatprep.subr.mxu0 0.0
    %221 = vmatpush1.msra.mxu0 %v170
    %222 = vmatprep.subr.mxu0 0.0
    %223 = vmatpush1.msra.mxu0 %v171
    %224 = vmatprep.subr.mxu0 0.0
    %225 = vmatpush1.msra.mxu0 %v172
    %226 = vmatprep.subr.mxu0 0.0
    %227 = vmatpush1.msra.mxu0 %v173
    %228 = vmatprep.subr.mxu0 0.0
    %229 = vmatpush1.msra.mxu0 %v174
    %230 = vmatprep.subr.mxu0 0.0
    %231 = vmatpush1.msra.mxu0 %v175
    %232 = vmatprep.subr.mxu0 0.0
    %233 = vmatpush1.msra.mxu0 %v176
    %234 = vmatprep.subr.mxu0 0.0
    %235 = vmatpush1.msra.mxu0 %v177
    %236 = vmatprep.subr.mxu0 0.0
    %237 = vmatpush1.msra.mxu0 %v178
    %238 = vmatprep.subr.mxu0 0.0
    %239 = vmatpush1.msra.mxu0 %v179
    %240 = vmatprep.subr.mxu0 0.0
    %241 = vmatpush1.msra.mxu0 %v180
    %242 = vmatprep.subr.mxu0 0.0
    %243 = vmatpush1.msra.mxu0 %v181
    %244 = vmatprep.subr.mxu0 0.0
    %245 = vmatpush1.msra.mxu0 %v182
    %246 = vmatprep.subr.mxu0 0.0
    %247 = vmatpush1.msra.mxu0 %v183
    %248 = vmatprep.mubr.f32.mxu0 %v149
    %249 = vmatmul.mubr.f32.gmra.mrb[0].mxu0 %v148
    %v250 = vpop.f32.mrb[0].mxu0
    %v251 = vadd.f32 0.0, %v250
    %v252 = vpop.f32.mrb[0].mxu0
    %253 = vmatprep.mubr.f32.mxu0 %v151
    %254 = vmatmul.mubr.f32.gmra.mrb[0].mxu0 %v150
    %v255 = vpop.f32.mrb[0].mxu0
    %v256 = vadd.f32 0.0, %v255
    %v257 = vpop.f32.mrb[0].mxu0
    %258 = vdwg.mxu0
    %v259 = vld [vmem:[#allocation6] sm:$0xff]
    %v260 = vld [vmem:[%s4] sm:$0xff]
    %v261 = vld [vmem:[%s4 + $0x8] sm:$0xff]
    %v262 = vadd.f32 %v259, %v260
    %263 = vst [vmem:[#allocation2] sm:$0xff] %v262
    %v264 = vadd.f32 %v251, %v261
    %265 = vst [vmem:[#allocation2 + $0x8] sm:$0xff] %v264
    %266 = vst [vmem:[#allocation2 + $0x10] sm:$0xff] %v262
    %v267 = vadd.f32 %v256, %v261
    %268 = vst [vmem:[#allocation2 + $0x18] sm:$0xff] %v267
    %v269 = vld [vmem:[#allocation2] sm:$0xff]
    %v270 = vld [vmem:[#allocation2 + $0x8] sm:$0xff]
    %v271 = vld [vmem:[#allocation2 + $0x10] sm:$0xff]
    %v272 = vld [vmem:[#allocation2 + $0x18] sm:$0xff]
    %273 = vadd.xlane.f32.xlu0 %v269
    %v274 = vpop.xlane.xlu0 %273
    %275 = vadd.xlane.f32.xlu0 %v270
    %v276 = vpop.xlane.xlu0 %275
    %277 = vadd.xlane.f32.xlu0 %v271
    %v278 = vpop.xlane.xlu0 %277
    %279 = vadd.xlane.f32.xlu0 %v272
    %v280 = vpop.xlane.xlu0 %279
    %v281 = vrcp.pop 128.0
    %v282 = vmul.f32 %v274, %v281
    %v283 = vmul.f32 %v276, %v281
    %v284 = vmul.f32 %v278, %v281
    %v285 = vmul.f32 %v280, %v281
    %v286 = vsub.f32 %v269, %v282
    %v287 = vsub.f32 %v270, %v283
    %v288 = vsub.f32 %v271, %v284
    %v289 = vsub.f32 %v272, %v285
    %v290 = vmul.f32 %v286, %v286
    %v291 = vmul.f32 %v287, %v287
    %v292 = vmul.f32 %v288, %v288
    %v293 = vmul.f32 %v289, %v289
    %294 = vadd.xlane.f32.xlu0 %v290
    %v295 = vpop.xlane.xlu0 %294
    %296 = vadd.xlane.f32.xlu0 %v291
    %v297 = vpop.xlane.xlu0 %296
    %298 = vadd.xlane.f32.xlu0 %v292
    %v299 = vpop.xlane.xlu0 %298
    %300 = vadd.xlane.f32.xlu0 %v293
    %v301 = vpop.xlane.xlu0 %300
    %v302 = vmul.f32 %v295, %v281
    %v303 = vmul.f32 %v297, %v281
    %v304 = vmul.f32 %v299, %v281
    %v305 = vmul.f32 %v301, %v281
    %v306 = vadd.f32 %v302, 1e-05
    %v307 = vadd.f32 %v303, 1e-05
    %v308 = vadd.f32 %v304, 1e-05
    %v309 = vadd.f32 %v305, 1e-05
    %v310 = vrsqrt.pop %v306
    %v311 = vrsqrt.pop %v307
    %v312 = vrsqrt.pop %v308
    %v313 = vrsqrt.pop %v309
    %v314 = vmul.f32 %v286, %v310
    %v315 = vmul.f32 %v287, %v311
    %v316 = vmul.f32 %v288, %v312
    %v317 = vmul.f32 %v289, %v313
    %v318 = vmul.f32 %v314, %v120
    %v319 = vmul.f32 %v315, %v120
    %v320 = vmul.f32 %v316, %v120
    %v321 = vmul.f32 %v317, %v120
    %v322 = vadd.f32 %v318, %v121
    %v323 = vadd.f32 %v319, %v121
    %v324 = vadd.f32 %v320, %v121
    %v325 = vadd.f32 %v321, %v121
    %v326 = vpack.c.bf16 %v323, %v322
    %v327 = vpack.c.bf16 %v325, %v324
    %v328 = vld [vmem:[#allocation8] sm:$0xff]
    %v329 = vld [vmem:[#allocation8 + $0x8] sm:$0xf]
    %v330 = vld [vmem:[#allocation8 + $0xc] sm:$0xff]
    %v331 = vld [vmem:[#allocation8 + $0x14] sm:$0xf]
    %v332 = vld [vmem:[#allocation8 + $0x18] sm:$0xff]
    %v333 = vld [vmem:[#allocation8 + $0x20] sm:$0xf]
    %v334 = vld [vmem:[#allocation8 + $0x24] sm:$0xff]
    %v335 = vld [vmem:[#allocation8 + $0x2c] sm:$0xf]
    %v336 = vld [vmem:[#allocation8 + $0x30] sm:$0xff]
    %v337 = vld [vmem:[#allocation8 + $0x38] sm:$0xf]
    %v338 = vld [vmem:[#allocation8 + $0x3c] sm:$0xff]
    %v339 = vld [vmem:[#allocation8 + $0x44] sm:$0xf]
    %v340 = vld [vmem:[#allocation8 + $0x48] sm:$0xff]
    %v341 = vld [vmem:[#allocation8 + $0x50] sm:$0xf]
    %v342 = vld [vmem:[#allocation8 + $0x54] sm:$0xff]
    %v343 = vld [vmem:[#allocation8 + $0x5c] sm:$0xf]
    %v344 = vld [vmem:[#allocation8 + $0x60] sm:$0xff]
    %v345 = vld [vmem:[#allocation8 + $0x68] sm:$0xf]
    %v346 = vld [vmem:[#allocation8 + $0x6c] sm:$0xff]
    %v347 = vld [vmem:[#allocation8 + $0x74] sm:$0xf]
    %v348 = vld [vmem:[#allocation8 + $0x78] sm:$0xff]
    %v349 = vld [vmem:[#allocation8 + $0x80] sm:$0xf]
    %v350 = vld [vmem:[#allocation8 + $0x84] sm:$0xff]
    %v351 = vld [vmem:[#allocation8 + $0x8c] sm:$0xf]
    %v352 = vld [vmem:[#allocation8 + $0x90] sm:$0xff]
    %v353 = vld [vmem:[#allocation8 + $0x98] sm:$0xf]
    %v354 = vld [vmem:[#allocation8 + $0x9c] sm:$0xff]
    %v355 = vld [vmem:[#allocation8 + $0xa4] sm:$0xf]
    %v356 = vld [vmem:[#allocation8 + $0xa8] sm:$0xff]
    %v357 = vld [vmem:[#allocation8 + $0xb0] sm:$0xf]
    %v358 = vld [vmem:[#allocation8 + $0xb4] sm:$0xff]
    %v359 = vld [vmem:[#allocation8 + $0xbc] sm:$0xf]
    %v392 = vunpack.c.l.b16 %v328
    %v393 = vunpack.c.h.b16 %v328
    %v394 = vunpack.c.l.b16 %v329
    %v395 = vunpack.c.l.b16 %v330
    %v396 = vunpack.c.h.b16 %v330
    %v397 = vunpack.c.l.b16 %v331
    %v398 = vunpack.c.l.b16 %v332
    %v399 = vunpack.c.h.b16 %v332
    %v400 = vunpack.c.l.b16 %v333
    %v401 = vunpack.c.l.b16 %v334
    %v402 = vunpack.c.h.b16 %v334
    %v403 = vunpack.c.l.b16 %v335
    %v404 = vunpack.c.l.b16 %v336
    %v405 = vunpack.c.h.b16 %v336
    %v406 = vunpack.c.l.b16 %v337
    %v407 = vunpack.c.l.b16 %v338
    %v408 = vunpack.c.h.b16 %v338
    %v409 = vunpack.c.l.b16 %v339
    %v410 = vunpack.c.l.b16 %v340
    %v411 = vunpack.c.h.b16 %v340
    %v412 = vunpack.c.l.b16 %v341
    %v413 = vunpack.c.l.b16 %v342
    %v414 = vunpack.c.h.b16 %v342
    %v415 = vunpack.c.l.b16 %v343
    %v416 = vunpack.c.l.b16 %v344
    %v417 = vunpack.c.h.b16 %v344
    %v418 = vunpack.c.l.b16 %v345
    %v419 = vunpack.c.l.b16 %v346
    %v420 = vunpack.c.h.b16 %v346
    %v421 = vunpack.c.l.b16 %v347
    %v422 = vunpack.c.l.b16 %v348
    %v423 = vunpack.c.h.b16 %v348
    %v424 = vunpack.c.l.b16 %v349
    %v425 = vunpack.c.l.b16 %v350
    %v426 = vunpack.c.h.b16 %v350
    %v427 = vunpack.c.l.b16 %v351
    %v428 = vunpack.c.l.b16 %v352
    %v429 = vunpack.c.h.b16 %v352
    %v430 = vunpack.c.l.b16 %v353
    %v431 = vunpack.c.l.b16 %v354
    %v432 = vunpack.c.h.b16 %v354
    %v433 = vunpack.c.l.b16 %v355
    %v434 = vunpack.c.l.b16 %v356
    %v435 = vunpack.c.h.b16 %v356
    %v436 = vunpack.c.l.b16 %v357
    %v437 = vunpack.c.l.b16 %v358
    %v438 = vunpack.c.h.b16 %v358
    %v439 = vunpack.c.l.b16 %v359
    %v440 = vpack.c.b16 %v395, %v392
    %v441 = vpack.c.b16 %v396, %v393
    %v442 = vpack.c.b16 %v397, %v394
    %v443 = vpack.c.b16 %v401, %v398
    %v444 = vpack.c.b16 %v402, %v399
    %v445 = vpack.c.b16 %v403, %v400
    %v446 = vpack.c.b16 %v407, %v404
    %v447 = vpack.c.b16 %v408, %v405
    %v448 = vpack.c.b16 %v409, %v406
    %v449 = vpack.c.b16 %v413, %v410
    %v450 = vpack.c.b16 %v414, %v411
    %v451 = vpack.c.b16 %v415, %v412
    %v452 = vpack.c.b16 %v419, %v416
    %v453 = vpack.c.b16 %v420, %v417
    %v454 = vpack.c.b16 %v421, %v418
    %v455 = vpack.c.b16 %v425, %v422
    %v456 = vpack.c.b16 %v426, %v423
    %v457 = vpack.c.b16 %v427, %v424
    %v458 = vpack.c.b16 %v431, %v428
    %v459 = vpack.c.b16 %v432, %v429
    %v460 = vpack.c.b16 %v433, %v430
    %v461 = vpack.c.b16 %v437, %v434
    %v462 = vpack.c.b16 %v438, %v435
    %v463 = vpack.c.b16 %v439, %v436
    %488 = vmatprep.subr.bf16.mxu0 %v441
    %489 = vmatpush1.bf16.msra.mxu0 %v440
    %490 = vmatprep.subr.bf16.mxu0 %v444
    %491 = vmatpush1.bf16.msra.mxu0 %v443
    %492 = vmatprep.subr.bf16.mxu0 %v447
    %493 = vmatpush1.bf16.msra.mxu0 %v446
    %494 = vmatprep.subr.bf16.mxu0 %v450
    %495 = vmatpush1.bf16.msra.mxu0 %v449
    %496 = vmatprep.subr.bf16.mxu0 %v453
    %497 = vmatpush1.bf16.msra.mxu0 %v452
    %498 = vmatprep.subr.bf16.mxu0 %v456
    %499 = vmatpush1.bf16.msra.mxu0 %v455
    %500 = vmatprep.subr.bf16.mxu0 %v459
    %501 = vmatpush1.bf16.msra.mxu0 %v458
    %502 = vmatprep.subr.bf16.mxu0 %v462
    %503 = vmatpush1.bf16.msra.mxu0 %v461
    %504 = vmatprep.subr.bf16.mxu0 0
    %505 = vmatpush1.bf16.msra.mxu0 0
    %506 = vmatprep.subr.bf16.mxu0 0
    %507 = vmatpush1.bf16.msra.mxu0 0
    %508 = vmatprep.subr.bf16.mxu0 0
    %509 = vmatpush1.bf16.msra.mxu0 0
    %510 = vmatprep.subr.bf16.mxu0 0
    %511 = vmatpush1.bf16.msra.mxu0 0
    %512 = vmatprep.subr.bf16.mxu0 0
    %513 = vmatpush1.bf16.msra.mxu0 0
    %514 = vmatprep.subr.bf16.mxu0 0
    %515 = vmatpush1.bf16.msra.mxu0 0
    %516 = vmatprep.subr.bf16.mxu0 0
    %517 = vmatpush1.bf16.msra.mxu0 0
    %518 = vmatprep.subr.bf16.mxu0 0
    %519 = vmatpush1.bf16.msra.mxu0 0
    %520 = vmatprep.mubr.bf16.mxu0 0
    %521 = vmatmul.mubr.bf16.gmra.mrb[0].mxu0 %v326
    %v522 = vpop.f32.mrb[0].mxu0
    %v523 = vadd.f32 0.0, %v522
    %v524 = vpop.f32.mrb[0].mxu0
    %v525 = vadd.f32 0.0, %v524
    %v526 = vpop.f32.mrb[0].mxu0
    %v527 = vadd.f32 0.0, %v526
    %v528 = vpop.f32.mrb[0].mxu0
    %v529 = vadd.f32 0.0, %v528
    %530 = vmatprep.mubr.bf16.mxu0 0
    %531 = vmatmul.mubr.bf16.gmra.mrb[0].mxu0 %v327
    %v532 = vpop.f32.mrb[0].mxu0
    %v533 = vadd.f32 0.0, %v532
    %v534 = vpop.f32.mrb[0].mxu0
    %v535 = vadd.f32 0.0, %v534
    %v536 = vpop.f32.mrb[0].mxu0
    %v537 = vadd.f32 0.0, %v536
    %v538 = vpop.f32.mrb[0].mxu0
    %v539 = vadd.f32 0.0, %v538
    %540 = vdwg.mxu0
    %541 = vmatprep.subr.bf16.mxu0 0
    %542 = vmatpush1.bf16.msra.mxu0 %v442
    %543 = vmatprep.subr.bf16.mxu0 0
    %544 = vmatpush1.bf16.msra.mxu0 %v445
    %545 = vmatprep.subr.bf16.mxu0 0
    %546 = vmatpush1.bf16.msra.mxu0 %v448
    %547 = vmatprep.subr.bf16.mxu0 0
    %548 = vmatpush1.bf16.msra.mxu0 %v451
    %549 = vmatprep.subr.bf16.mxu0 0
    %550 = vmatpush1.bf16.msra.mxu0 %v454
    %551 = vmatprep.subr.bf16.mxu0 0
    %552 = vmatpush1.bf16.msra.mxu0 %v457
    %553 = vmatprep.subr.bf16.mxu0 0
    %554 = vmatpush1.bf16.msra.mxu0 %v460
    %555 = vmatprep.subr.bf16.mxu0 0
    %556 = vmatpush1.bf16.msra.mxu0 %v463
    %557 = vmatprep.subr.bf16.mxu0 0
    %558 = vmatpush1.bf16.msra.mxu0 0
    %559 = vmatprep.subr.bf16.mxu0 0
    %560 = vmatpush1.bf16.msra.mxu0 0
    %561 = vmatprep.subr.bf16.mxu0 0
    %562 = vmatpush1.bf16.msra.mxu0 0
    %563 = vmatprep.subr.bf16.mxu0 0
    %564 = vmatpush1.bf16.msra.mxu0 0
    %565 = vmatprep.subr.bf16.mxu0 0
    %566 = vmatpush1.bf16.msra.mxu0 0
    %567 = vmatprep.subr.bf16.mxu0 0
    %568 = vmatpush1.bf16.msra.mxu0 0
    %569 = vmatprep.subr.bf16.mxu0 0
    %570 = vmatpush1.bf16.msra.mxu0 0
    %571 = vmatprep.subr.bf16.mxu0 0
    %572 = vmatpush1.bf16.msra.mxu0 0
    %573 = vmatprep.mubr.bf16.mxu0 0
    %574 = vmatmul.mubr.bf16.gmra.mrb[0].mxu0 %v326
    %v575 = vpop.f32.mrb[0].mxu0
    %v576 = vadd.f32 0.0, %v575
    %v577 = vpop.f32.mrb[0].mxu0
    %v578 = vpop.f32.mrb[0].mxu0
    %v579 = vadd.f32 0.0, %v578
    %v580 = vpop.f32.mrb[0].mxu0
    %581 = vmatprep.mubr.bf16.mxu0 0
    %582 = vmatmul.mubr.bf16.gmra.mrb[0].mxu0 %v327
    %v583 = vpop.f32.mrb[0].mxu0
    %v584 = vadd.f32 0.0, %v583
    %v585 = vpop.f32.mrb[0].mxu0
    %v586 = vpop.f32.mrb[0].mxu0
    %v587 = vadd.f32 0.0, %v586
    %v588 = vpop.f32.mrb[0].mxu0
    %589 = vdwg.mxu0
    %590 = vmatprep.subr.mxu0 0.0
    %591 = vmatpush1.xpose.msra.mxu0 %v525
    %592 = vmatprep.subr.mxu0 0.0
    %593 = vmatpush1.xpose.msra.mxu0 %v529
    %594 = vmatprep.subr.mxu0 0.0
    %595 = vmatpush1.xpose.msra.mxu0 %v535
    %596 = vmatprep.subr.mxu0 0.0
    %597 = vmatpush1.xpose.msra.mxu0 %v539
    %598 = vmatprep.subr.mxu0 0.0
    %599 = vmatpush1.xpose.msra.mxu0 0.0
    %600 = vmatprep.subr.mxu0 0.0
    %601 = vmatpush1.xpose.msra.mxu0 0.0
    %602 = vmatprep.subr.mxu0 0.0
    %603 = vmatpush1.xpose.msra.mxu0 0.0
    %604 = vmatprep.subr.mxu0 0.0
    %605 = vmatpush1.xpose.msra.mxu0 0.0
    %606 = vmatprep.subr.mxu0 0.0
    %607 = vmatpush1.xpose.msra.mxu0 0.0
    %608 = vmatprep.subr.mxu0 0.0
    %609 = vmatpush1.xpose.msra.mxu0 0.0
    %610 = vmatprep.subr.mxu0 0.0
    %611 = vmatpush1.xpose.msra.mxu0 0.0
    %612 = vmatprep.subr.mxu0 0.0
    %613 = vmatpush1.xpose.msra.mxu0 0.0
    %614 = vmatprep.subr.mxu0 0.0
    %615 = vmatpush1.xpose.msra.mxu0 0.0
    %616 = vmatprep.subr.mxu0 0.0
    %617 = vmatpush1.xpose.msra.mxu0 0.0
    %618 = vmatprep.subr.mxu0 0.0
    %619 = vmatpush1.xpose.msra.mxu0 0.0
    %620 = vmatprep.subr.mxu0 0.0
    %621 = vmatpush1.xpose.msra.mxu0 0.0
    %622 = vmatprep.subr.mxu0 0.0
    %623 = vmatpush1.xpose.msra.mxu0 0.0
    %624 = vmatprep.subr.mxu0 0.0
    %625 = vmatpush1.xpose.msra.mxu0 0.0
    %626 = vmatprep.subr.mxu0 0.0
    %627 = vmatpush1.xpose.msra.mxu0 0.0
    %628 = vmatprep.subr.mxu0 0.0
    %629 = vmatpush1.xpose.msra.mxu0 0.0
    %630 = vmatprep.subr.mxu0 0.0
    %631 = vmatpush1.xpose.msra.mxu0 0.0
    %632 = vmatprep.subr.mxu0 0.0
    %633 = vmatpush1.xpose.msra.mxu0 0.0
    %634 = vmatprep.subr.mxu0 0.0
    %635 = vmatpush1.xpose.msra.mxu0 0.0
    %636 = vmatprep.subr.mxu0 0.0
    %637 = vmatpush1.xpose.msra.mxu0 0.0
    %638 = vmatprep.subr.mxu0 0.0
    %639 = vmatpush1.xpose.msra.mxu0 0.0
    %640 = vmatprep.subr.mxu0 0.0
    %641 = vmatpush1.xpose.msra.mxu0 0.0
    %642 = vmatprep.subr.mxu0 0.0
    %643 = vmatpush1.xpose.msra.mxu0 0.0
    %644 = vmatprep.subr.mxu0 0.0
    %645 = vmatpush1.xpose.msra.mxu0 0.0
    %646 = vmatprep.subr.mxu0 0.0
    %647 = vmatpush1.xpose.msra.mxu0 0.0
    %648 = vmatprep.subr.mxu0 0.0
    %649 = vmatpush1.xpose.msra.mxu0 0.0
    %650 = vmatprep.subr.mxu0 0.0
    %651 = vmatpush1.xpose.msra.mxu0 0.0
    %652 = vmatprep.subr.mxu0 0.0
    %653 = vmatpush1.xpose.msra.mxu0 0.0
    %654 = vmatprep.mubr.f32.mxu0 0.0
    %655 = vmatmul.mubr.f32.gmra.mrb[0].mxu0 %v523
    %v656 = vpop.f32.mrb[0].mxu0
    %v657 = vadd.f32 0.0, %v656
    %v658 = vpop.f32.mrb[0].mxu0
    %659 = vmatprep.mubr.f32.mxu0 0.0
    %660 = vmatmul.mubr.f32.gmra.mrb[0].mxu0 %v527
    %v661 = vpop.f32.mrb[0].mxu0
    %v662 = vadd.f32 0.0, %v661
    %v663 = vpop.f32.mrb[0].mxu0
    %664 = vmatprep.mubr.f32.mxu0 0.0
    %665 = vmatmul.mubr.f32.gmra.mrb[0].mxu0 %v533
    %v666 = vpop.f32.mrb[0].mxu0
    %v667 = vadd.f32 0.0, %v666
    %v668 = vpop.f32.mrb[0].mxu0
    %669 = vmatprep.mubr.f32.mxu0 0.0
    %670 = vmatmul.mubr.f32.gmra.mrb[0].mxu0 %v537
    %v671 = vpop.f32.mrb[0].mxu0
    %v672 = vadd.f32 0.0, %v671
    %v673 = vpop.f32.mrb[0].mxu0
    %674 = vdwg.mxu0
    %v675 = vmul.f32 %v657, 0.088388346
    %v676 = vmul.f32 %v662, 0.088388346
    %v677 = vmul.f32 %v667, 0.088388346
    %v678 = vmul.f32 %v672, 0.088388346
    %v679 = vld [vmem:[%s1] sm:$0xff]
    %v680 = vld [vmem:[%s1 + $0x8] sm:$0xff]
    %v681 = vld [vmem:[%s1 + $0x10] sm:$0xff]
    %v682 = vld [vmem:[%s1 + $0x18] sm:$0xff]
    %v683 = vadd.f32 %v675, %v679
    %v684 = vadd.f32 %v676, %v680
    %v685 = vadd.f32 %v677, %v681
    %v686 = vadd.f32 %v678, %v682
    %vm687 = vcmask 261120
    %v688 = vsel %vm687, %v683, -inf
    %689 = vmax.xlane.f32.xlu0 %v688
    %v690 = vpop.xlane.xlu0 %689
    %v691 = vsel %vm687, %v684, -inf
    %692 = vmax.xlane.f32.xlu0 %v691
    %v693 = vpop.xlane.xlu0 %692
    %v694 = vsel %vm687, %v685, -inf
    %695 = vmax.xlane.f32.xlu0 %v694
    %v696 = vpop.xlane.xlu0 %695
    %v697 = vsel %vm687, %v686, -inf
    %698 = vmax.xlane.f32.xlu0 %v697
    %v699 = vpop.xlane.xlu0 %698
    %v700 = vsub.f32 %v683, %v690
    %v701 = vsub.f32 %v684, %v693
    %v702 = vsub.f32 %v685, %v696
    %v703 = vsub.f32 %v686, %v699
    %v704 = vmul.f32 %v700, 1.442695
    %v705 = vpow.pop %v704
    %v706 = vmul.f32 %v701, 1.442695
    %v707 = vpow.pop %v706
    %v708 = vmul.f32 %v702, 1.442695
    %v709 = vpow.pop %v708
    %v710 = vmul.f32 %v703, 1.442695
    %v711 = vpow.pop %v710
    %v712 = vsel %vm687, %v705, 0.0
    %713 = vadd.xlane.f32.xlu0 %v712
    %v714 = vpop.xlane.xlu0 %713
    %v715 = vsel %vm687, %v707, 0.0
    %716 = vadd.xlane.f32.xlu0 %v715
    %v717 = vpop.xlane.xlu0 %716
    %v718 = vsel %vm687, %v709, 0.0
    %719 = vadd.xlane.f32.xlu0 %v718
    %v720 = vpop.xlane.xlu0 %719
    %v721 = vsel %vm687, %v711, 0.0
    %722 = vadd.xlane.f32.xlu0 %v721
    %v723 = vpop.xlane.xlu0 %722
    %v724 = vrcp.pop %v714
    %v725 = vrcp.pop %v717
    %v726 = vrcp.pop %v720
    %v727 = vrcp.pop %v723
    %v728 = vmul.f32 %v705, %v724
    %v729 = vmul.f32 %v707, %v725
    %v730 = vmul.f32 %v709, %v726
    %v731 = vmul.f32 %v711, %v727
    %v732 = vpack.c.bf16 %v729, %v728
    %v733 = vpack.c.bf16 %v731, %v730
    %v734 = vpack.c.bf16 %v579, %v576
    %v735 = vpack.c.bf16 %v587, %v584
    %v737 = vsel %vm687, %v732, 0
    %v740 = vsel %vm687, %v733, 0
    %742 = vmatprep.subr.bf16.mxu0 0
    %743 = vmatpush1.bf16.msra.mxu0 %v734
    %744 = vmatprep.subr.bf16.mxu0 0
    %745 = vmatpush1.bf16.msra.mxu0 %v735
    %746 = vmatprep.subr.bf16.mxu0 0
    %747 = vmatpush1.bf16.msra.mxu0 0
    %748 = vmatprep.subr.bf16.mxu0 0
    %749 = vmatpush1.bf16.msra.mxu0 0
    %750 = vmatprep.subr.bf16.mxu0 0
    %751 = vmatpush1.bf16.msra.mxu0 0
    %752 = vmatprep.subr.bf16.mxu0 0
    %753 = vmatpush1.bf16.msra.mxu0 0
    %754 = vmatprep.subr.bf16.mxu0 0
    %755 = vmatpush1.bf16.msra.mxu0 0
    %756 = vmatprep.subr.bf16.mxu0 0
    %757 = vmatpush1.bf16.msra.mxu0 0
    %758 = vmatprep.subr.bf16.mxu0 0
    %759 = vmatpush1.bf16.msra.mxu0 0
    %760 = vmatprep.subr.bf16.mxu0 0
    %761 = vmatpush1.bf16.msra.mxu0 0
    %762 = vmatprep.subr.bf16.mxu0 0
    %763 = vmatpush1.bf16.msra.mxu0 0
    %764 = vmatprep.subr.bf16.mxu0 0
    %765 = vmatpush1.bf16.msra.mxu0 0
    %766 = vmatprep.subr.bf16.mxu0 0
    %767 = vmatpush1.bf16.msra.mxu0 0
    %768 = vmatprep.subr.bf16.mxu0 0
    %769 = vmatpush1.bf16.msra.mxu0 0
    %770 = vmatprep.subr.bf16.mxu0 0
    %771 = vmatpush1.bf16.msra.mxu0 0
    %772 = vmatprep.subr.bf16.mxu0 0
    %773 = vmatpush1.bf16.msra.mxu0 0
    %774 = vmatprep.mubr.bf16.mxu0 0
    %775 = vmatmul.mubr.bf16.gmra.mrb[0].mxu0 %v737
    %v776 = vpop.f32.mrb[0].mxu0
    %v777 = vadd.f32 0.0, %v776
    %v778 = vpop.f32.mrb[0].mxu0
    %v779 = vpop.f32.mrb[0].mxu0
    %v780 = vadd.f32 0.0, %v779
    %v781 = vpop.f32.mrb[0].mxu0
    %782 = vmatprep.mubr.bf16.mxu0 0
    %783 = vmatmul.mubr.bf16.gmra.mrb[0].mxu0 %v740
    %v784 = vpop.f32.mrb[0].mxu0
    %v785 = vadd.f32 0.0, %v784
    %v786 = vpop.f32.mrb[0].mxu0
    %v787 = vpop.f32.mrb[0].mxu0
    %v788 = vadd.f32 0.0, %v787
    %v789 = vpop.f32.mrb[0].mxu0
    %790 = vdwg.mxu0
    %v791 = vpack.c.bf16 %v780, %v777
    %v792 = vpack.c.bf16 %v788, %v785
    %v793 = vld [vmem:[%s6] sm:$0xf]
    %v794 = vld [vmem:[%s6 + $0x4] sm:$0xf]
    %v795 = vld [vmem:[%s6 + $0x8] sm:$0xf]
    %v796 = vld [vmem:[%s6 + $0xc] sm:$0xf]
    %v797 = vld [vmem:[%s6 + $0x10] sm:$0xf]
    %v798 = vld [vmem:[%s6 + $0x14] sm:$0xf]
    %v799 = vld [vmem:[%s6 + $0x18] sm:$0xf]
    %v800 = vld [vmem:[%s6 + $0x1c] sm:$0xf]
    %v801 = vld [vmem:[%s6 + $0x20] sm:$0xf]
    %v802 = vld [vmem:[%s6 + $0x24] sm:$0xf]
    %v803 = vld [vmem:[%s6 + $0x28] sm:$0xf]
    %v804 = vld [vmem:[%s6 + $0x2c] sm:$0xf]
    %v805 = vld [vmem:[%s6 + $0x30] sm:$0xf]
    %v806 = vld [vmem:[%s6 + $0x34] sm:$0xf]
    %v807 = vld [vmem:[%s6 + $0x38] sm:$0xf]
    %v808 = vld [vmem:[%s6 + $0x3c] sm:$0xf]
    %v825 = vunpack.c.l.b16 %v793
    %v826 = vunpack.c.l.b16 %v794
    %v827 = vunpack.c.l.b16 %v795
    %v828 = vunpack.c.l.b16 %v796
    %v829 = vunpack.c.l.b16 %v797
    %v830 = vunpack.c.l.b16 %v798
    %v831 = vunpack.c.l.b16 %v799
    %v832 = vunpack.c.l.b16 %v800
    %v833 = vunpack.c.l.b16 %v801
    %v834 = vunpack.c.l.b16 %v802
    %v835 = vunpack.c.l.b16 %v803
    %v836 = vunpack.c.l.b16 %v804
    %v837 = vunpack.c.l.b16 %v805
    %v838 = vunpack.c.l.b16 %v806
    %v839 = vunpack.c.l.b16 %v807
    %v840 = vunpack.c.l.b16 %v808
    %v841 = vpack.c.b16 %v826, %v825
    %v842 = vpack.c.b16 %v828, %v827
    %v843 = vpack.c.b16 %v830, %v829
    %v844 = vpack.c.b16 %v832, %v831
    %v845 = vpack.c.b16 %v834, %v833
    %v846 = vpack.c.b16 %v836, %v835
    %v847 = vpack.c.b16 %v838, %v837
    %v848 = vpack.c.b16 %v840, %v839
    %857 = vmatprep.subr.bf16.mxu0 0
    %858 = vmatpush1.bf16.msra.mxu0 %v841
    %859 = vmatprep.subr.bf16.mxu0 0
    %860 = vmatpush1.bf16.msra.mxu0 %v842
    %861 = vmatprep.subr.bf16.mxu0 0
    %862 = vmatpush1.bf16.msra.mxu0 %v843
    %863 = vmatprep.subr.bf16.mxu0 0
    %864 = vmatpush1.bf16.msra.mxu0 %v844
    %865 = vmatprep.subr.bf16.mxu0 0
    %866 = vmatpush1.bf16.msra.mxu0 %v845
    %867 = vmatprep.subr.bf16.mxu0 0
    %868 = vmatpush1.bf16.msra.mxu0 %v846
    %869 = vmatprep.subr.bf16.mxu0 0
    %870 = vmatpush1.bf16.msra.mxu0 %v847
    %871 = vmatprep.subr.bf16.mxu0 0
    %872 = vmatpush1.bf16.msra.mxu0 %v848
    %873 = vmatprep.subr.bf16.mxu0 0
    %874 = vmatpush1.bf16.msra.mxu0 0
    %875 = vmatprep.subr.bf16.mxu0 0
    %876 = vmatpush1.bf16.msra.mxu0 0
    %877 = vmatprep.subr.bf16.mxu0 0
    %878 = vmatpush1.bf16.msra.mxu0 0
    %879 = vmatprep.subr.bf16.mxu0 0
    %880 = vmatpush1.bf16.msra.mxu0 0
    %881 = vmatprep.subr.bf16.mxu0 0
    %882 = vmatpush1.bf16.msra.mxu0 0
    %883 = vmatprep.subr.bf16.mxu0 0
    %884 = vmatpush1.bf16.msra.mxu0 0
    %885 = vmatprep.subr.bf16.mxu0 0
    %886 = vmatpush1.bf16.msra.mxu0 0
    %887 = vmatprep.subr.bf16.mxu0 0
    %888 = vmatpush1.bf16.msra.mxu0 0
    %889 = vmatprep.mubr.bf16.mxu0 0
    %890 = vmatmul.mubr.bf16.gmra.mrb[0].mxu0 %v791
    %v891 = vpop.f32.mrb[0].mxu0
    %v892 = vadd.f32 0.0, %v891
    %v893 = vpop.f32.mrb[0].mxu0
    %v894 = vpop.f32.mrb[0].mxu0
    %v895 = vadd.f32 0.0, %v894
    %v896 = vpop.f32.mrb[0].mxu0
    %897 = vmatprep.mubr.bf16.mxu0 0
    %898 = vmatmul.mubr.bf16.gmra.mrb[0].mxu0 %v792
    %v899 = vpop.f32.mrb[0].mxu0
    %v900 = vadd.f32 0.0, %v899
    %v901 = vpop.f32.mrb[0].mxu0
    %v902 = vpop.f32.mrb[0].mxu0
    %v903 = vadd.f32 0.0, %v902
    %v904 = vpop.f32.mrb[0].mxu0
    %905 = vdwg.mxu0
    %v906 = vadd.f32 %v269, %v892
    %v907 = vadd.f32 %v270, %v895
    %v908 = vadd.f32 %v271, %v900
    %v909 = vadd.f32 %v272, %v903
    %910 = vadd.xlane.f32.xlu0 %v906
    %v911 = vpop.xlane.xlu0 %910
    %912 = vadd.xlane.f32.xlu0 %v907
    %v913 = vpop.xlane.xlu0 %912
    %914 = vadd.xlane.f32.xlu0 %v908
    %v915 = vpop.xlane.xlu0 %914
    %916 = vadd.xlane.f32.xlu0 %v909
    %v917 = vpop.xlane.xlu0 %916
    %v918 = vmul.f32 %v911, %v281
    %v919 = vmul.f32 %v913, %v281
    %v920 = vmul.f32 %v915, %v281
    %v921 = vmul.f32 %v917, %v281
    %v922 = vsub.f32 %v906, %v918
    %v923 = vsub.f32 %v907, %v919
    %v924 = vsub.f32 %v908, %v920
    %v925 = vsub.f32 %v909, %v921
    %v926 = vmul.f32 %v922, %v922
    %v927 = vmul.f32 %v923, %v923
    %v928 = vmul.f32 %v924, %v924
    %v929 = vmul.f32 %v925, %v925
    %930 = vadd.xlane.f32.xlu0 %v926
    %v931 = vpop.xlane.xlu0 %930
    %932 = vadd.xlane.f32.xlu0 %v927
    %v933 = vpop.xlane.xlu0 %932
    %934 = vadd.xlane.f32.xlu0 %v928
    %v935 = vpop.xlane.xlu0 %934
    %936 = vadd.xlane.f32.xlu0 %v929
    %v937 = vpop.xlane.xlu0 %936
    %v938 = vmul.f32 %v931, %v281
    %v939 = vmul.f32 %v933, %v281
    %v940 = vmul.f32 %v935, %v281
    %v941 = vmul.f32 %v937, %v281
    %v942 = vadd.f32 %v938, 1e-05
    %v943 = vadd.f32 %v939, 1e-05
    %v944 = vadd.f32 %v940, 1e-05
    %v945 = vadd.f32 %v941, 1e-05
    %v946 = vrsqrt.pop %v942
    %v947 = vrsqrt.pop %v943
    %v948 = vrsqrt.pop %v944
    %v949 = vrsqrt.pop %v945
    %v950 = vmul.f32 %v922, %v946
    %v951 = vmul.f32 %v923, %v947
    %v952 = vmul.f32 %v924, %v948
    %v953 = vmul.f32 %v925, %v949
    %v954 = vmul.f32 %v950, %v122
    %v955 = vmul.f32 %v951, %v122
    %v956 = vmul.f32 %v952, %v122
    %v957 = vmul.f32 %v953, %v122
    %v958 = vadd.f32 %v954, %v123
    %v959 = vadd.f32 %v955, %v123
    %v960 = vadd.f32 %v956, %v123
    %v961 = vadd.f32 %v957, %v123
    %v962 = vpack.c.bf16 %v959, %v958
    %v963 = vpack.c.bf16 %v961, %v960
    %v964 = vld [vmem:[#allocation9] sm:$0xff]
    %v965 = vld [vmem:[#allocation9 + $0x8] sm:$0xff]
    %v966 = vld [vmem:[#allocation9 + $0x10] sm:$0xff]
    %v967 = vld [vmem:[#allocation9 + $0x18] sm:$0xff]
    %v968 = vld [vmem:[#allocation9 + $0x20] sm:$0xff]
    %v969 = vld [vmem:[#allocation9 + $0x28] sm:$0xff]
    %v970 = vld [vmem:[#allocation9 + $0x30] sm:$0xff]
    %v971 = vld [vmem:[#allocation9 + $0x38] sm:$0xff]
    %v972 = vld [vmem:[#allocation9 + $0x40] sm:$0xff]
    %v973 = vld [vmem:[#allocation9 + $0x48] sm:$0xff]
    %v974 = vld [vmem:[#allocation9 + $0x50] sm:$0xff]
    %v975 = vld [vmem:[#allocation9 + $0x58] sm:$0xff]
    %v976 = vld [vmem:[#allocation9 + $0x60] sm:$0xff]
    %v977 = vld [vmem:[#allocation9 + $0x68] sm:$0xff]
    %v978 = vld [vmem:[#allocation9 + $0x70] sm:$0xff]
    %v979 = vld [vmem:[#allocation9 + $0x78] sm:$0xff]
    %v981 = vlaneseq
    %v982 = vshrl.u32 %v981, 7
    %v983 = vsub.s32 0, %v982
    %v984 = vrot.slane %v127, %v983
    %v985 = vlaneseq
    %v986 = vshrl.u32 %v985, 7
    %v987 = vsub.s32 1, %v986
    %v988 = vrot.slane %v127, %v987
    %v1007 = vunpack.c.l.b16 %v964
    %v1008 = vunpack.c.h.b16 %v964
    %v1009 = vunpack.c.l.b16 %v965
    %v1010 = vunpack.c.h.b16 %v965
    %v1011 = vunpack.c.l.b16 %v966
    %v1012 = vunpack.c.h.b16 %v966
    %v1013 = vunpack.c.l.b16 %v967
    %v1014 = vunpack.c.h.b16 %v967
    %v1015 = vunpack.c.l.b16 %v968
    %v1016 = vunpack.c.h.b16 %v968
    %v1017 = vunpack.c.l.b16 %v969
    %v1018 = vunpack.c.h.b16 %v969
    %v1019 = vunpack.c.l.b16 %v970
    %v1020 = vunpack.c.h.b16 %v970
    %v1021 = vunpack.c.l.b16 %v971
    %v1022 = vunpack.c.h.b16 %v971
    %v1023 = vunpack.c.l.b16 %v972
    %v1024 = vunpack.c.h.b16 %v972
    %v1025 = vunpack.c.l.b16 %v973
    %v1026 = vunpack.c.h.b16 %v973
    %v1027 = vunpack.c.l.b16 %v974
    %v1028 = vunpack.c.h.b16 %v974
    %v1029 = vunpack.c.l.b16 %v975
    %v1030 = vunpack.c.h.b16 %v975
    %v1031 = vunpack.c.l.b16 %v976
    %v1032 = vunpack.c.h.b16 %v976
    %v1033 = vunpack.c.l.b16 %v977
    %v1034 = vunpack.c.h.b16 %v977
    %v1035 = vunpack.c.l.b16 %v978
    %v1036 = vunpack.c.h.b16 %v978
    %v1037 = vunpack.c.l.b16 %v979
    %v1038 = vunpack.c.h.b16 %v979
    %v1039 = vpack.c.b16 %v1009, %v1007
    %v1040 = vpack.c.b16 %v1010, %v1008
    %v1041 = vpack.c.b16 %v1013, %v1011
    %v1042 = vpack.c.b16 %v1014, %v1012
    %v1043 = vpack.c.b16 %v1017, %v1015
    %v1044 = vpack.c.b16 %v1018, %v1016
    %v1045 = vpack.c.b16 %v1021, %v1019
    %v1046 = vpack.c.b16 %v1022, %v1020
    %v1047 = vpack.c.b16 %v1025, %v1023
    %v1048 = vpack.c.b16 %v1026, %v1024
    %v1049 = vpack.c.b16 %v1029, %v1027
    %v1050 = vpack.c.b16 %v1030, %v1028
    %v1051 = vpack.c.b16 %v1033, %v1031
    %v1052 = vpack.c.b16 %v1034, %v1032
    %v1053 = vpack.c.b16 %v1037, %v1035
    %v1054 = vpack.c.b16 %v1038, %v1036
    %1071 = vmatprep.subr.bf16.mxu0 %v1040
    %1072 = vmatpush1.bf16.msra.mxu0 %v1039
    %1073 = vmatprep.subr.bf16.mxu0 %v1042
    %1074 = vmatpush1.bf16.msra.mxu0 %v1041
    %1075 = vmatprep.subr.bf16.mxu0 %v1044
    %1076 = vmatpush1.bf16.msra.mxu0 %v1043
    %1077 = vmatprep.subr.bf16.mxu0 %v1046
    %1078 = vmatpush1.bf16.msra.mxu0 %v1045
    %1079 = vmatprep.subr.bf16.mxu0 %v1048
    %1080 = vmatpush1.bf16.msra.mxu0 %v1047
    %1081 = vmatprep.subr.bf16.mxu0 %v1050
    %1082 = vmatpush1.bf16.msra.mxu0 %v1049
    %1083 = vmatprep.subr.bf16.mxu0 %v1052
    %1084 = vmatpush1.bf16.msra.mxu0 %v1051
    %1085 = vmatprep.subr.bf16.mxu0 %v1054
    %1086 = vmatpush1.bf16.msra.mxu0 %v1053
    %1087 = vmatprep.subr.bf16.mxu0 0
    %1088 = vmatpush1.bf16.msra.mxu0 0
    %1089 = vmatprep.subr.bf16.mxu0 0
    %1090 = vmatpush1.bf16.msra.mxu0 0
    %1091 = vmatprep.subr.bf16.mxu0 0
    %1092 = vmatpush1.bf16.msra.mxu0 0
    %1093 = vmatprep.subr.bf16.mxu0 0
    %1094 = vmatpush1.bf16.msra.mxu0 0
    %1095 = vmatprep.subr.bf16.mxu0 0
    %1096 = vmatpush1.bf16.msra.mxu0 0
    %1097 = vmatprep.subr.bf16.mxu0 0
    %1098 = vmatpush1.bf16.msra.mxu0 0
    %1099 = vmatprep.subr.bf16.mxu0 0
    %1100 = vmatpush1.bf16.msra.mxu0 0
    %1101 = vmatprep.subr.bf16.mxu0 0
    %1102 = vmatpush1.bf16.msra.mxu0 0
    %1103 = vmatprep.mubr.bf16.mxu0 0
    %1104 = vmatmul.mubr.bf16.gmra.mrb[0].mxu0 %v962
    %v1105 = vpop.f32.mrb[0].mxu0
    %v1106 = vadd.f32 %v984, %v1105
    %v1107 = vpop.f32.mrb[0].mxu0
    %v1108 = vadd.f32 %v988, %v1107
    %v1109 = vpop.f32.mrb[0].mxu0
    %v1110 = vadd.f32 %v984, %v1109
    %v1111 = vpop.f32.mrb[0].mxu0
    %v1112 = vadd.f32 %v988, %v1111
    %1113 = vmatprep.mubr.bf16.mxu0 0
    %1114 = vmatmul.mubr.bf16.gmra.mrb[0].mxu0 %v963
    %v1115 = vpop.f32.mrb[0].mxu0
    %v1116 = vadd.f32 %v984, %v1115
    %v1117 = vpop.f32.mrb[0].mxu0
    %v1118 = vadd.f32 %v988, %v1117
    %v1119 = vpop.f32.mrb[0].mxu0
    %v1120 = vadd.f32 %v984, %v1119
    %v1121 = vpop.f32.mrb[0].mxu0
    %v1122 = vadd.f32 %v988, %v1121
    %1123 = vdwg.mxu0
    %v1124 = vmul.f32 %v1106, 0.5
    %v1125 = vmul.f32 %v1108, 0.5
    %v1126 = vmul.f32 %v1110, 0.5
    %v1127 = vmul.f32 %v1112, 0.5
    %v1128 = vmul.f32 %v1116, 0.5
    %v1129 = vmul.f32 %v1118, 0.5
    %v1130 = vmul.f32 %v1120, 0.5
    %v1131 = vmul.f32 %v1122, 0.5
    %v1132 = vmul.f32 %v1106, 0.044715
    %v1133 = vmul.f32 %v1108, 0.044715
    %v1134 = vmul.f32 %v1110, 0.044715
    %v1135 = vmul.f32 %v1112, 0.044715
    %v1136 = vmul.f32 %v1116, 0.044715
    %v1137 = vmul.f32 %v1118, 0.044715
    %v1138 = vmul.f32 %v1120, 0.044715
    %v1139 = vmul.f32 %v1122, 0.044715
    %v1140 = vmul.f32 %v1132, %v1106
    %v1141 = vmul.f32 %v1133, %v1108
    %v1142 = vmul.f32 %v1134, %v1110
    %v1143 = vmul.f32 %v1135, %v1112
    %v1144 = vmul.f32 %v1136, %v1116
    %v1145 = vmul.f32 %v1137, %v1118
    %v1146 = vmul.f32 %v1138, %v1120
    %v1147 = vmul.f32 %v1139, %v1122
    %v1148 = vmul.f32 %v1140, %v1106
    %v1149 = vmul.f32 %v1141, %v1108
    %v1150 = vmul.f32 %v1142, %v1110
    %v1151 = vmul.f32 %v1143, %v1112
    %v1152 = vmul.f32 %v1144, %v1116
    %v1153 = vmul.f32 %v1145, %v1118
    %v1154 = vmul.f32 %v1146, %v1120
    %v1155 = vmul.f32 %v1147, %v1122
    %v1156 = vadd.f32 %v1106, %v1148
    %v1157 = vadd.f32 %v1108, %v1149
    %v1158 = vadd.f32 %v1110, %v1150
    %v1159 = vadd.f32 %v1112, %v1151
    %v1160 = vadd.f32 %v1116, %v1152
    %v1161 = vadd.f32 %v1118, %v1153
    %v1162 = vadd.f32 %v1120, %v1154
    %v1163 = vadd.f32 %v1122, %v1155
    %v1164 = vmul.f32 %v1156, 0.7978846
    %v1165 = vmul.f32 %v1157, 0.7978846
    %v1166 = vmul.f32 %v1158, 0.7978846
    %v1167 = vmul.f32 %v1159, 0.7978846
    %v1168 = vmul.f32 %v1160, 0.7978846
    %v1169 = vmul.f32 %v1161, 0.7978846
    %v1170 = vmul.f32 %v1162, 0.7978846
    %v1171 = vmul.f32 %v1163, 0.7978846
    %v1172 = vtanh.pop %v1164
    %v1173 = vtanh.pop %v1165
    %v1174 = vtanh.pop %v1166
    %v1175 = vtanh.pop %v1167
    %v1176 = vtanh.pop %v1168
    %v1177 = vtanh.pop %v1169
    %v1178 = vtanh.pop %v1170
    %v1179 = vtanh.pop %v1171
    %v1180 = vadd.f32 %v1172, 1.0
    %v1181 = vadd.f32 %v1173, 1.0
    %v1182 = vadd.f32 %v1174, 1.0
    %v1183 = vadd.f32 %v1175, 1.0
    %v1184 = vadd.f32 %v1176, 1.0
    %v1185 = vadd.f32 %v1177, 1.0
    %v1186 = vadd.f32 %v1178, 1.0
    %v1187 = vadd.f32 %v1179, 1.0
    %v1188 = vmul.f32 %v1124, %v1180
    %v1189 = vmul.f32 %v1125, %v1181
    %v1190 = vmul.f32 %v1126, %v1182
    %v1191 = vmul.f32 %v1127, %v1183
    %v1192 = vmul.f32 %v1128, %v1184
    %v1193 = vmul.f32 %v1129, %v1185
    %v1194 = vmul.f32 %v1130, %v1186
    %v1195 = vmul.f32 %v1131, %v1187
    %v1196 = vpack.c.bf16 %v1190, %v1188
    %v1197 = vpack.c.bf16 %v1191, %v1189
    %v1198 = vpack.c.bf16 %v1194, %v1192
    %v1199 = vpack.c.bf16 %v1195, %v1193
    %v1200 = vld [vmem:[#allocation11] sm:$0xf]
    %v1201 = vld [vmem:[#allocation11 + $0x4] sm:$0xf]
    %v1202 = vld [vmem:[#allocation11 + $0x8] sm:$0xf]
    %v1203 = vld [vmem:[#allocation11 + $0xc] sm:$0xf]
    %v1204 = vld [vmem:[#allocation11 + $0x10] sm:$0xf]
    %v1205 = vld [vmem:[#allocation11 + $0x14] sm:$0xf]
    %v1206 = vld [vmem:[#allocation11 + $0x18] sm:$0xf]
    %v1207 = vld [vmem:[#allocation11 + $0x1c] sm:$0xf]
    %v1208 = vld [vmem:[#allocation11 + $0x20] sm:$0xf]
    %v1209 = vld [vmem:[#allocation11 + $0x24] sm:$0xf]
    %v1210 = vld [vmem:[#allocation11 + $0x28] sm:$0xf]
    %v1211 = vld [vmem:[#allocation11 + $0x2c] sm:$0xf]
    %v1212 = vld [vmem:[#allocation11 + $0x30] sm:$0xf]
    %v1213 = vld [vmem:[#allocation11 + $0x34] sm:$0xf]
    %v1214 = vld [vmem:[#allocation11 + $0x38] sm:$0xf]
    %v1215 = vld [vmem:[#allocation11 + $0x3c] sm:$0xf]
    %v1216 = vld [vmem:[#allocation11 + $0x40] sm:$0xf]
    %v1217 = vld [vmem:[#allocation11 + $0x44] sm:$0xf]
    %v1218 = vld [vmem:[#allocation11 + $0x48] sm:$0xf]
    %v1219 = vld [vmem:[#allocation11 + $0x4c] sm:$0xf]
    %v1220 = vld [vmem:[#allocation11 + $0x50] sm:$0xf]
    %v1221 = vld [vmem:[#allocation11 + $0x54] sm:$0xf]
    %v1222 = vld [vmem:[#allocation11 + $0x58] sm:$0xf]
    %v1223 = vld [vmem:[#allocation11 + $0x5c] sm:$0xf]
    %v1224 = vld [vmem:[#allocation11 + $0x60] sm:$0xf]
    %v1225 = vld [vmem:[#allocation11 + $0x64] sm:$0xf]
    %v1226 = vld [vmem:[#allocation11 + $0x68] sm:$0xf]
    %v1227 = vld [vmem:[#allocation11 + $0x6c] sm:$0xf]
    %v1228 = vld [vmem:[#allocation11 + $0x70] sm:$0xf]
    %v1229 = vld [vmem:[#allocation11 + $0x74] sm:$0xf]
    %v1230 = vld [vmem:[#allocation11 + $0x78] sm:$0xf]
    %v1231 = vld [vmem:[#allocation11 + $0x7c] sm:$0xf]
    %v1264 = vunpack.c.l.b16 %v1200
    %v1265 = vunpack.c.l.b16 %v1201
    %v1266 = vunpack.c.l.b16 %v1202
    %v1267 = vunpack.c.l.b16 %v1203
    %v1268 = vunpack.c.l.b16 %v1204
    %v1269 = vunpack.c.l.b16 %v1205
    %v1270 = vunpack.c.l.b16 %v1206
    %v1271 = vunpack.c.l.b16 %v1207
    %v1272 = vunpack.c.l.b16 %v1208
    %v1273 = vunpack.c.l.b16 %v1209
    %v1274 = vunpack.c.l.b16 %v1210
    %v1275 = vunpack.c.l.b16 %v1211
    %v1276 = vunpack.c.l.b16 %v1212
    %v1277 = vunpack.c.l.b16 %v1213
    %v1278 = vunpack.c.l.b16 %v1214
    %v1279 = vunpack.c.l.b16 %v1215
    %v1280 = vunpack.c.l.b16 %v1216
    %v1281 = vunpack.c.l.b16 %v1217
    %v1282 = vunpack.c.l.b16 %v1218
    %v1283 = vunpack.c.l.b16 %v1219
    %v1284 = vunpack.c.l.b16 %v1220
    %v1285 = vunpack.c.l.b16 %v1221
    %v1286 = vunpack.c.l.b16 %v1222
    %v1287 = vunpack.c.l.b16 %v1223
    %v1288 = vunpack.c.l.b16 %v1224
    %v1289 = vunpack.c.l.b16 %v1225
    %v1290 = vunpack.c.l.b16 %v1226
    %v1291 = vunpack.c.l.b16 %v1227
    %v1292 = vunpack.c.l.b16 %v1228
    %v1293 = vunpack.c.l.b16 %v1229
    %v1294 = vunpack.c.l.b16 %v1230
    %v1295 = vunpack.c.l.b16 %v1231
    %v1296 = vpack.c.b16 %v1265, %v1264
    %v1297 = vpack.c.b16 %v1267, %v1266
    %v1298 = vpack.c.b16 %v1269, %v1268
    %v1299 = vpack.c.b16 %v1271, %v1270
    %v1300 = vpack.c.b16 %v1273, %v1272
    %v1301 = vpack.c.b16 %v1275, %v1274
    %v1302 = vpack.c.b16 %v1277, %v1276
    %v1303 = vpack.c.b16 %v1279, %v1278
    %v1304 = vpack.c.b16 %v1281, %v1280
    %v1305 = vpack.c.b16 %v1283, %v1282
    %v1306 = vpack.c.b16 %v1285, %v1284
    %v1307 = vpack.c.b16 %v1287, %v1286
    %v1308 = vpack.c.b16 %v1289, %v1288
    %v1309 = vpack.c.b16 %v1291, %v1290
    %v1310 = vpack.c.b16 %v1293, %v1292
    %v1311 = vpack.c.b16 %v1295, %v1294
    %1328 = vmatprep.subr.bf16.mxu0 0
    %1329 = vmatpush1.bf16.msra.mxu0 %v1296
    %1330 = vmatprep.subr.bf16.mxu0 0
    %1331 = vmatpush1.bf16.msra.mxu0 %v1297
    %1332 = vmatprep.subr.bf16.mxu0 0
    %1333 = vmatpush1.bf16.msra.mxu0 %v1298
    %1334 = vmatprep.subr.bf16.mxu0 0
    %1335 = vmatpush1.bf16.msra.mxu0 %v1299
    %1336 = vmatprep.subr.bf16.mxu0 0
    %1337 = vmatpush1.bf16.msra.mxu0 %v1300
    %1338 = vmatprep.subr.bf16.mxu0 0
    %1339 = vmatpush1.bf16.msra.mxu0 %v1301
    %1340 = vmatprep.subr.bf16.mxu0 0
    %1341 = vmatpush1.bf16.msra.mxu0 %v1302
    %1342 = vmatprep.subr.bf16.mxu0 0
    %1343 = vmatpush1.bf16.msra.mxu0 %v1303
    %1344 = vmatprep.subr.bf16.mxu0 0
    %1345 = vmatpush1.bf16.msra.mxu0 %v1304
    %1346 = vmatprep.subr.bf16.mxu0 0
    %1347 = vmatpush1.bf16.msra.mxu0 %v1305
    %1348 = vmatprep.subr.bf16.mxu0 0
    %1349 = vmatpush1.bf16.msra.mxu0 %v1306
    %1350 = vmatprep.subr.bf16.mxu0 0
    %1351 = vmatpush1.bf16.msra.mxu0 %v1307
    %1352 = vmatprep.subr.bf16.mxu0 0
    %1353 = vmatpush1.bf16.msra.mxu0 %v1308
    %1354 = vmatprep.subr.bf16.mxu0 0
    %1355 = vmatpush1.bf16.msra.mxu0 %v1309
    %1356 = vmatprep.subr.bf16.mxu0 0
    %1357 = vmatpush1.bf16.msra.mxu0 %v1310
    %1358 = vmatprep.subr.bf16.mxu0 0
    %1359 = vmatpush1.bf16.msra.mxu0 %v1311
    %1360 = vmatprep.mubr.bf16.mxu0 %v1197
    %1361 = vmatmul.mubr.bf16.gmra.mrb[0].mxu0 %v1196
    %v1362 = vpop.f32.mrb[0].mxu0
    %v1363 = vadd.f32 0.0, %v1362
    %v1364 = vpop.f32.mrb[0].mxu0
    %v1365 = vpop.f32.mrb[0].mxu0
    %v1366 = vadd.f32 0.0, %v1365
    %v1367 = vpop.f32.mrb[0].mxu0
    %1368 = vmatprep.mubr.bf16.mxu0 %v1199
    %1369 = vmatmul.mubr.bf16.gmra.mrb[0].mxu0 %v1198
    %v1370 = vpop.f32.mrb[0].mxu0
    %v1371 = vadd.f32 0.0, %v1370
    %v1372 = vpop.f32.mrb[0].mxu0
    %v1373 = vpop.f32.mrb[0].mxu0
    %v1374 = vadd.f32 0.0, %v1373
    %v1375 = vpop.f32.mrb[0].mxu0
    %1376 = vdwg.mxu0
    %v1377 = vadd.f32 %v906, %v1363
    %v1378 = vadd.f32 %v907, %v1366
    %v1379 = vadd.f32 %v908, %v1371
    %v1380 = vadd.f32 %v909, %v1374
    %v1381 = vadd.f32 %v1377, %v128
    %v1382 = vadd.f32 %v1378, %v128
    %v1383 = vadd.f32 %v1379, %v128
    %v1384 = vadd.f32 %v1380, %v128
    %1385 = vadd.xlane.f32.xlu0 %v1381
    %v1386 = vpop.xlane.xlu0 %1385
    %1387 = vadd.xlane.f32.xlu0 %v1382
    %v1388 = vpop.xlane.xlu0 %1387
    %1389 = vadd.xlane.f32.xlu0 %v1383
    %v1390 = vpop.xlane.xlu0 %1389
    %1391 = vadd.xlane.f32.xlu0 %v1384
    %v1392 = vpop.xlane.xlu0 %1391
    %v1393 = vmul.f32 %v1386, %v281
    %v1394 = vmul.f32 %v1388, %v281
    %v1395 = vmul.f32 %v1390, %v281
    %v1396 = vmul.f32 %v1392, %v281
    %v1397 = vsub.f32 %v1381, %v1393
    %v1398 = vsub.f32 %v1382, %v1394
    %v1399 = vsub.f32 %v1383, %v1395
    %v1400 = vsub.f32 %v1384, %v1396
    %v1401 = vmul.f32 %v1397, %v1397
    %v1402 = vmul.f32 %v1398, %v1398
    %v1403 = vmul.f32 %v1399, %v1399
    %v1404 = vmul.f32 %v1400, %v1400
    %1405 = vadd.xlane.f32.xlu0 %v1401
    %v1406 = vpop.xlane.xlu0 %1405
    %1407 = vadd.xlane.f32.xlu0 %v1402
    %v1408 = vpop.xlane.xlu0 %1407
    %1409 = vadd.xlane.f32.xlu0 %v1403
    %v1410 = vpop.xlane.xlu0 %1409
    %1411 = vadd.xlane.f32.xlu0 %v1404
    %v1412 = vpop.xlane.xlu0 %1411
    %v1413 = vmul.f32 %v1406, %v281
    %v1414 = vmul.f32 %v1408, %v281
    %v1415 = vmul.f32 %v1410, %v281
    %v1416 = vmul.f32 %v1412, %v281
    %v1417 = vadd.f32 %v1413, 1e-05
    %v1418 = vadd.f32 %v1414, 1e-05
    %v1419 = vadd.f32 %v1415, 1e-05
    %v1420 = vadd.f32 %v1416, 1e-05
    %v1421 = vrsqrt.pop %v1417
    %v1422 = vrsqrt.pop %v1418
    %v1423 = vrsqrt.pop %v1419
    %v1424 = vrsqrt.pop %v1420
    %v1425 = vmul.f32 %v1397, %v1421
    %v1426 = vmul.f32 %v1398, %v1422
    %v1427 = vmul.f32 %v1399, %v1423
    %v1428 = vmul.f32 %v1400, %v1424
    %v1429 = vmul.f32 %v1425, %v124
    %v1430 = vmul.f32 %v1426, %v124
    %v1431 = vmul.f32 %v1427, %v124
    %v1432 = vmul.f32 %v1428, %v124
    %v1433 = vadd.f32 %v1429, %v125
    %v1434 = vadd.f32 %v1430, %v125
    %v1435 = vadd.f32 %v1431, %v125
    %v1436 = vadd.f32 %v1432, %v125
    %v1437 = vpack.c.bf16 %v1434, %v1433
    %v1438 = vpack.c.bf16 %v1436, %v1435
    %v1439 = vld [vmem:[#allocation12] sm:$0xff]
    %v1440 = vld [vmem:[#allocation12 + $0x8] sm:$0xff]
    %v1441 = vld [vmem:[#allocation12 + $0x10] sm:$0xff]
    %v1442 = vld [vmem:[#allocation12 + $0x18] sm:$0xff]
    %v1443 = vld [vmem:[#allocation12 + $0x20] sm:$0xff]
    %v1444 = vld [vmem:[#allocation12 + $0x28] sm:$0xff]
    %v1445 = vld [vmem:[#allocation12 + $0x30] sm:$0xff]
    %v1446 = vld [vmem:[#allocation12 + $0x38] sm:$0xff]
    %v1447 = vld [vmem:[#allocation12 + $0x40] sm:$0xff]
    %v1448 = vld [vmem:[#allocation12 + $0x48] sm:$0xff]
    %v1449 = vld [vmem:[#allocation12 + $0x50] sm:$0xff]
    %v1450 = vld [vmem:[#allocation12 + $0x58] sm:$0xff]
    %v1451 = vld [vmem:[#allocation12 + $0x60] sm:$0xff]
    %v1452 = vld [vmem:[#allocation12 + $0x68] sm:$0xff]
    %v1453 = vld [vmem:[#allocation12 + $0x70] sm:$0xff]
    %v1454 = vld [vmem:[#allocation12 + $0x78] sm:$0xff]
    %v1471 = vunpack.c.l.b16 %v1439
    %v1472 = vunpack.c.h.b16 %v1439
    %v1473 = vunpack.c.l.b16 %v1440
    %v1474 = vunpack.c.h.b16 %v1440
    %v1475 = vunpack.c.l.b16 %v1441
    %v1476 = vunpack.c.h.b16 %v1441
    %v1477 = vunpack.c.l.b16 %v1442
    %v1478 = vunpack.c.h.b16 %v1442
    %v1479 = vunpack.c.l.b16 %v1443
    %v1480 = vunpack.c.h.b16 %v1443
    %v1481 = vunpack.c.l.b16 %v1444
    %v1482 = vunpack.c.h.b16 %v1444
    %v1483 = vunpack.c.l.b16 %v1445
    %v1484 = vunpack.c.h.b16 %v1445
    %v1485 = vunpack.c.l.b16 %v1446
    %v1486 = vunpack.c.h.b16 %v1446
    %v1487 = vunpack.c.l.b16 %v1447
    %v1488 = vunpack.c.h.b16 %v1447
    %v1489 = vunpack.c.l.b16 %v1448
    %v1490 = vunpack.c.h.b16 %v1448
    %v1491 = vunpack.c.l.b16 %v1449
    %v1492 = vunpack.c.h.b16 %v1449
    %v1493 = vunpack.c.l.b16 %v1450
    %v1494 = vunpack.c.h.b16 %v1450
    %v1495 = vunpack.c.l.b16 %v1451
    %v1496 = vunpack.c.h.b16 %v1451
    %v1497 = vunpack.c.l.b16 %v1452
    %v1498 = vunpack.c.h.b16 %v1452
    %v1499 = vunpack.c.l.b16 %v1453
    %v1500 = vunpack.c.h.b16 %v1453
    %v1501 = vunpack.c.l.b16 %v1454
    %v1502 = vunpack.c.h.b16 %v1454
    %v1503 = vpack.c.b16 %v1473, %v1471
    %v1504 = vpack.c.b16 %v1474, %v1472
    %v1505 = vpack.c.b16 %v1477, %v1475
    %v1506 = vpack.c.b16 %v1478, %v1476
    %v1507 = vpack.c.b16 %v1481, %v1479
    %v1508 = vpack.c.b16 %v1482, %v1480
    %v1509 = vpack.c.b16 %v1485, %v1483
    %v1510 = vpack.c.b16 %v1486, %v1484
    %v1511 = vpack.c.b16 %v1489, %v1487
    %v1512 = vpack.c.b16 %v1490, %v1488
    %v1513 = vpack.c.b16 %v1493, %v1491
    %v1514 = vpack.c.b16 %v1494, %v1492
    %v1515 = vpack.c.b16 %v1497, %v1495
    %v1516 = vpack.c.b16 %v1498, %v1496
    %v1517 = vpack.c.b16 %v1501, %v1499
    %v1518 = vpack.c.b16 %v1502, %v1500
    %1535 = vmatprep.subr.bf16.mxu0 %v1504
    %1536 = vmatpush1.bf16.msra.mxu0 %v1503
    %1537 = vmatprep.subr.bf16.mxu0 %v1506
    %1538 = vmatpush1.bf16.msra.mxu0 %v1505
    %1539 = vmatprep.subr.bf16.mxu0 %v1508
    %1540 = vmatpush1.bf16.msra.mxu0 %v1507
    %1541 = vmatprep.subr.bf16.mxu0 %v1510
    %1542 = vmatpush1.bf16.msra.mxu0 %v1509
    %1543 = vmatprep.subr.bf16.mxu0 %v1512
    %1544 = vmatpush1.bf16.msra.mxu0 %v1511
    %1545 = vmatprep.subr.bf16.mxu0 %v1514
    %1546 = vmatpush1.bf16.msra.mxu0 %v1513
    %1547 = vmatprep.subr.bf16.mxu0 %v1516
    %1548 = vmatpush1.bf16.msra.mxu0 %v1515
    %1549 = vmatprep.subr.bf16.mxu0 %v1518
    %1550 = vmatpush1.bf16.msra.mxu0 %v1517
    %1551 = vmatprep.subr.bf16.mxu0 0
    %1552 = vmatpush1.bf16.msra.mxu0 0
    %1553 = vmatprep.subr.bf16.mxu0 0
    %1554 = vmatpush1.bf16.msra.mxu0 0
    %1555 = vmatprep.subr.bf16.mxu0 0
    %1556 = vmatpush1.bf16.msra.mxu0 0
    %1557 = vmatprep.subr.bf16.mxu0 0
    %1558 = vmatpush1.bf16.msra.mxu0 0
    %1559 = vmatprep.subr.bf16.mxu0 0
    %1560 = vmatpush1.bf16.msra.mxu0 0
    %1561 = vmatprep.subr.bf16.mxu0 0
    %1562 = vmatpush1.bf16.msra.mxu0 0
    %1563 = vmatprep.subr.bf16.mxu0 0
    %1564 = vmatpush1.bf16.msra.mxu0 0
    %1565 = vmatprep.subr.bf16.mxu0 0
    %1566 = vmatpush1.bf16.msra.mxu0 0
    %1567 = vmatprep.mubr.bf16.mxu0 0
    %1568 = vmatmul.mubr.bf16.gmra.mrb[0].mxu0 %v1437
    %v1569 = vpop.f32.mrb[0].mxu0
    %v1570 = vadd.f32 0.0, %v1569
    %v1571 = vpop.f32.mrb[0].mxu0
    %v1572 = vadd.f32 0.0, %v1571
    %v1573 = vpop.f32.mrb[0].mxu0
    %v1574 = vadd.f32 0.0, %v1573
    %v1575 = vpop.f32.mrb[0].mxu0
    %v1576 = vadd.f32 0.0, %v1575
    %1577 = vmatprep.mubr.bf16.mxu0 0
    %1578 = vmatmul.mubr.bf16.gmra.mrb[0].mxu0 %v1438
    %v1579 = vpop.f32.mrb[0].mxu0
    %v1580 = vadd.f32 0.0, %v1579
    %v1581 = vpop.f32.mrb[0].mxu0
    %v1582 = vadd.f32 0.0, %v1581
    %v1583 = vpop.f32.mrb[0].mxu0
    %v1584 = vadd.f32 0.0, %v1583
    %v1585 = vpop.f32.mrb[0].mxu0
    %v1586 = vadd.f32 0.0, %v1585
    %1587 = vdwg.mxu0
    %1588 = vst [vmem:[#allocation14] sm:$0xff] %v1570
    %1589 = vst [vmem:[#allocation14 + $0x8] sm:$0xff] %v1572
    %1590 = vst [vmem:[#allocation14 + $0x10] sm:$0xff] %v1574
    %1591 = vst [vmem:[#allocation14 + $0x18] sm:$0xff] %v1576
    %1592 = vst [vmem:[#allocation14 + $0x20] sm:$0xff] %v1580
    %1593 = vst [vmem:[#allocation14 + $0x28] sm:$0xff] %v1582
    %1594 = vst [vmem:[#allocation14 + $0x30] sm:$0xff] %v1584
    %1595 = vst [vmem:[#allocation14 + $0x38] sm:$0xff] %v1586
    // Predicated region
    $region70: #{prompt_model_forward.1} parent=1 // pred_check
      _
    $region71: #{prompt_model_forward.1} parent=1 // pred_check_branch
      %1597 = sbr.rel (0) target = $region73
    $region72: #{prompt_model_forward.1} parent=1 // pred_region
      %s1599 = ssub.s32 1024, 1024
      %1600 = vsyncadd [#allocation5], %s1599
      %s1601 = sshll.u32 [#allocation14], 4
      %s1602 = int_to_ptr.vmem [resolvable:$true] %s1601
      %1607 = dma.vmem_to_hbm [thread:$0]  %s1602, 1024, %s11, [#allocation5], 256, 256, 16
    $region73: #{prompt_model_forward.1} parent=1 // pred_fallthru
      _
    // Predicated region
    $region74: #{prompt_model_forward.1} parent=1 // pred_check
      _
    $region75: #{prompt_model_forward.1} parent=1 // pred_check_branch
      %1609 = sbr.rel (0) target = $region77
    $region76: #{prompt_model_forward.1} parent=1 // pred_region
      %1610 = dma.done [#allocation5], 1024
    $region77: #{prompt_model_forward.1} parent=1 // pred_fallthru
      _
    %1611 = vsyncpa [#allocation4], 1
    %1612 = vsyncpa [#allocation7], 1
    %1613 = vsyncpa [#allocation10], 1
    %1614 = vsyncpa [#allocation13], 1
    %1615 = vsyncpa [#allocation5], 1

</llo_original>
